<compile_context>
chip_gen: v7x
topology: tpu7x:2x2x1
jax: 0.10.0
libtpu: 0.0.40
codegen_flags: <defaults>
</compile_context>

<pallas_src>
import functools
import math

import jax
import jax.numpy as jnp
from jax import lax
from jax.experimental import pallas as pl
from jax.experimental.pallas import tpu as pltpu

T_FRAMES = 8  # hard-coded T in the PyTorch forward


def _largest_tile(m, target):
    """Largest divisor of m that is a multiple of 8 and <= target.

    Falls back to the full extent m only when no such divisor exists (the
    block must still satisfy the (8, 128) last-two-dims rule); the fallback is
    explicit and callers only pass small row counts here.
    """
    upper = min(target, m)
    for t in range(upper, 7, -1):
        if m % t == 0 and t % 8 == 0:
            return t
    return m


# ----------------------------------------------------------------------------
# Kernel 1: AvgPool3d(kernel=(1,4,4)) as a matmul with a constant pooling matrix
# ----------------------------------------------------------------------------
def _pool_kernel(x_ref, p_ref, o_ref):
    # (tm, H*W) @ (H*W, Hp*Wp) on the MXU.  The one-hot pooling matmul does
    # 16x redundant MACs, but at these sizes it is negligible and avoids
    # lane-level strided VPU gathers.
    o_ref[...] = jnp.dot(x_ref[...], p_ref[...],
                         preferred_element_type=jnp.float32)


def _make_pool_matrix(H, W):
    Hp, Wp = H // 4, W // 4
    hw = jnp.arange(H * W)
    hh = hw // W
    ww = hw % W
    cols = (hh // 4) * Wp + (ww // 4)
    return jax.nn.one_hot(cols, Hp * Wp, dtype=jnp.float32) / 16.0


def _avg_pool(x2d, pmat, tm_target=256):
    M, K = x2d.shape
    N = pmat.shape[1]
    tm = _largest_tile(M, tm_target)
    return pl.pallas_call(
        _pool_kernel,
        out_shape=jax.ShapeDtypeStruct((M, N), jnp.float32),
        grid=(M // tm,),
        in_specs=[pl.BlockSpec((tm, K), lambda i: (i, 0)),
                  pl.BlockSpec((K, N), lambda i: (0, 0))],
        out_specs=pl.BlockSpec((tm, N), lambda i: (i, 0)),
        compiler_params=pltpu.CompilerParams(
            dimension_semantics=("parallel",)),
    )(x2d, pmat)


# ----------------------------------------------------------------------------
# Kernel 2: fused Q/K/V projection + attention + (folded) fc
#   grid = (B, L // tq); K and V' are computed once per batch element into
#   VMEM scratch at qi == 0 and reused by every q-tile.
# ----------------------------------------------------------------------------
def _fused_attention_kernel(inp_ref, val_ref, wq_ref, bq_ref, wk_ref, bk_ref,
                            wvf_ref, bvf_ref, bf_ref, out_ref, aw_ref,
                            k_sc, v_sc, *, tq):
    qi = pl.program_id(1)

    # Once per batch element: K projection and fc-folded V projection.
    @pl.when(qi == 0)
    def _():
        x = inp_ref[0]                                            # (L, C)
        k_sc[...] = jnp.dot(x, wk_ref[...],
                            preferred_element_type=jnp.float32) + bk_ref[...]
        v_sc[...] = jnp.dot(val_ref[0], wvf_ref[...],
                            preferred_element_type=jnp.float32) + bvf_ref[...]

    # Per q-tile: Q projection (1/sqrt(hidden) pre-folded into Wq/bq).
    row0 = pl.multiple_of(qi * tq, tq)
    xq = inp_ref[0, pl.ds(row0, tq), :]                           # (tq, C)
    q = jnp.dot(xq, wq_ref[...],
                preferred_element_type=jnp.float32) + bq_ref[...]  # (tq, D)

    # Scores, stable softmax with a row reciprocal (EUP work on (tq,1) only).
    s = lax.dot_general(q, k_sc[...], (((1,), (1,)), ((), ())),
                        preferred_element_type=jnp.float32)        # (tq, L)
    m = jnp.max(s, axis=-1, keepdims=True)
    p = jnp.exp(s - m)
    denom = jnp.sum(p, axis=-1, keepdims=True)
    attn = p * pl.reciprocal(denom, approx=False)
    aw_ref[0] = attn                                    # lane-dense (tq, L)

    # fc folded into V':  (A @ V) @ Wf^T + bf == A @ V' + bf
    out_ref[0] = jnp.dot(attn, v_sc[...],
                         preferred_element_type=jnp.float32) + bf_ref[...]


def _fused_attention(inp, val, wq_t, bq, wk_t, bk, wvf_t, bvf, bf,
                     tq_target=128):
    B, L, C = inp.shape
    Lv, Cv = val.shape[1], val.shape[2]
    D = wq_t.shape[1]
    assert Lv == L, "key length must equal value length"
    tq = _largest_tile(L, tq_target)
    kernel = functools.partial(_fused_attention_kernel, tq=tq)
    out, aw = pl.pallas_call(
        kernel,
        out_shape=(jax.ShapeDtypeStruct((B, L, D), jnp.float32),
                   jax.ShapeDtypeStruct((B, L, L), jnp.float32)),
        grid=(B, L // tq),
        in_specs=[pl.BlockSpec((1, L, C), lambda b, i: (b, 0, 0)),
                  pl.BlockSpec((1, L, Cv), lambda b, i: (b, 0, 0)),
                  pl.BlockSpec((C, D), lambda b, i: (0, 0)),
                  pl.BlockSpec((1, D), lambda b, i: (0, 0)),
                  pl.BlockSpec((C, D), lambda b, i: (0, 0)),
                  pl.BlockSpec((1, D), lambda b, i: (0, 0)),
                  pl.BlockSpec((Cv, D), lambda b, i: (0, 0)),
                  pl.BlockSpec((1, D), lambda b, i: (0, 0)),
                  pl.BlockSpec((1, D), lambda b, i: (0, 0))],
        out_specs=(pl.BlockSpec((1, tq, D), lambda b, i: (b, i, 0)),
                   pl.BlockSpec((1, tq, L), lambda b, i: (b, i, 0))),
        scratch_shapes=[pltpu.VMEM((L, D), jnp.float32),   # K
                        pltpu.VMEM((L, D), jnp.float32)],  # V' = V @ Wf^T
        compiler_params=pltpu.CompilerParams(
            dimension_semantics=("parallel", "arbitrary")),
    )(inp, val, wq_t, bq.reshape(1, D), wk_t, bk.reshape(1, D),
      wvf_t, bvf.reshape(1, D), bf.reshape(1, D))
    return out, aw


# ----------------------------------------------------------------------------
# Full forward pass
# ----------------------------------------------------------------------------
def attention_block_forward(x, value, Wq, bq, Wk, bk, Wv, bv, Wf, bf):
    """x: (NT, C, H, W); value: (nt, l, c); weights in PyTorch (out, in) layout."""
    NT, C, H, W = x.shape
    assert NT % T_FRAMES == 0 and H % 4 == 0 and W % 4 == 0
    Hp, Wp = H // 4, W // 4
    B = NT // T_FRAMES
    L = Hp * Wp * T_FRAMES
    hidden = Wq.shape[0]
    nt, l, c = value.shape
    assert c == hidden and l * T_FRAMES == L and nt == NT

    # --- AvgPool3d((1,4,4)) as a Pallas matmul kernel ---
    pmat = _make_pool_matrix(H, W)                         # (H*W, Hp*Wp)
    pooled2d = _avg_pool(x.reshape(NT * C, H * W), pmat)   # (NT*C, Hp*Wp)

    # --- PyTorch row-major reshapes (same flat element order; XLA glue) ---
    inp = pooled2d.reshape(B, L, C)
    val = value.reshape(B, l * T_FRAMES, c)

    # --- one-time wrapper-side weight prep (tiny) ---
    scale = 1.0 / math.sqrt(hidden)
    wq_t = Wq.T * scale          # fold 1/sqrt(hidden) into the Q projection
    bq_s = bq * scale
    wk_t = Wk.T
    wvf_t = (Wf @ Wv).T          # fold fc into the V projection
    bvf = Wf @ bv

    attn_out, attn_w = _fused_attention(inp, val, wq_t, bq_s, wk_t, bk,
                                        wvf_t, bvf, bf)

    return attn_out.reshape(nt, l, hidden), attn_w


# ----------------------------------------------------------------------------
# Pure-JAX reference of the same forward pass (correctness check)
# ----------------------------------------------------------------------------
def _reference_forward(x, value, Wq, bq, Wk, bk, Wv, bv, Wf, bf):
    with jax.default_matmul_precision("highest"):
        NT, C, H, W = x.shape
        pooled = x.reshape(NT, C, H // 4, 4, W // 4, 4).mean(axis=(3, 5))
        _, _, Hp, Wp = pooled.shape
        inp = pooled.reshape(NT // T_FRAMES, Hp * Wp * T_FRAMES, C)
        nt, l, c = value.shape
        val = value.reshape(nt // T_FRAMES, l * T_FRAMES, c)
        q = inp @ Wq.T + bq
        k = inp @ Wk.T + bk
        v = val @ Wv.T + bv
        hidden = Wq.shape[0]
        aw = jnp.matmul(q, jnp.swapaxes(k, 1, 2)) / (hidden ** 0.5)
        aw = jax.nn.softmax(aw, axis=-1)
        ao = jnp.matmul(aw, v)
        ao = ao @ Wf.T + bf
        return ao.reshape(nt, l, c), aw


if __name__ == "__main__":
    key = jax.random.PRNGKey(0)
    ks = jax.random.split(key, 10)

    NT, C, H, W = 16, 32, 16, 16      # input_dim = 32, two groups of T=8 frames
    hidden = 32
    l_tok = (H // 4) * (W // 4)       # 16 tokens per frame so L_q == L_v

    x = jax.random.normal(ks[0], (NT, C, H, W), dtype=jnp.float32)
    value = jax.random.normal(ks[1], (NT, l_tok, hidden), dtype=jnp.float32)
    Wq = 0.1 * jax.random.normal(ks[2], (hidden, C), dtype=jnp.float32)
    bq = 0.1 * jax.random.normal(ks[3], (hidden,), dtype=jnp.float32)
    Wk = 0.1 * jax.random.normal(ks[4], (hidden, C), dtype=jnp.float32)
    bk = 0.1 * jax.random.normal(ks[5], (hidden,), dtype=jnp.float32)
    Wv = 0.1 * jax.random.normal(ks[6], (hidden, hidden), dtype=jnp.float32)
    bv = 0.1 * jax.random.normal(ks[7], (hidden,), dtype=jnp.float32)
    Wf = 0.1 * jax.random.normal(ks[8], (hidden, hidden), dtype=jnp.float32)
    bf = 0.1 * jax.random.normal(ks[9], (hidden,), dtype=jnp.float32)

    fwd = jax.jit(attention_block_forward)
    out, attn_w = fwd(x, value, Wq, bq, Wk, bk, Wv, bv, Wf, bf)
    out = jax.block_until_ready(out)
    attn_w = jax.block_until_ready(attn_w)

    ref_out, ref_aw = _reference_forward(x, value, Wq, bq, Wk, bk, Wv, bv,
                                         Wf, bf)
    assert out.shape == (NT, l_tok, hidden)
    assert attn_w.shape == (NT // T_FRAMES, l_tok * T_FRAMES,
                            l_tok * T_FRAMES)
    assert jnp.allclose(out, ref_out, atol=1e-3, rtol=1e-3), (
        float(jnp.max(jnp.abs(out - ref_out))))
    assert jnp.allclose(attn_w, ref_aw, atol=1e-4, rtol=1e-3), (
        float(jnp.max(jnp.abs(attn_w - ref_aw))))

    print("KERNEL_OK")
</pallas_src>

<mosaic_0001>
module attributes {stable_mosaic.version = 11 : i64} {
  func.func @_pool_kernel(%arg0: i32, %arg1: memref<256x256xf32, #tpu.memory_space<vmem>>, %arg2: memref<256x16xf32, #tpu.memory_space<vmem>>, %arg3: memref<256x16xf32, #tpu.memory_space<vmem>>) attributes {dimension_semantics = [#tpu.dimension_semantics<parallel>], iteration_bounds = array<i64: 2>, scalar_prefetch = 0 : i64, scratch_operands = 0 : i64, tpu.core_type = #tpu.core_type<tc>, window_params = [{transform_indices = @transform_0, window_bounds = array<i64: 256, 256>}, {pipeline_mode = #tpu.pipeline_mode<synchronous>, transform_indices = @transform_1, window_bounds = array<i64: 256, 16>}, {transform_indices = @transform_2, window_bounds = array<i64: 256, 16>}]} {
    %c0 = arith.constant 0 : index
    %c0_0 = arith.constant 0 : index
    %0 = vector.load %arg1[%c0, %c0_0] : memref<256x256xf32, #tpu.memory_space<vmem>>, vector<256x256xf32>
    %c0_1 = arith.constant 0 : index
    %c0_2 = arith.constant 0 : index
    %1 = vector.load %arg2[%c0_1, %c0_2] : memref<256x16xf32, #tpu.memory_space<vmem>>, vector<256x16xf32>
    %cst = arith.constant dense<0.000000e+00> : vector<256x16xf32>
    %2 = tpu.matmul %0, %1, %cst {dimension_numbers = #tpu.dot_dimension_numbers<[1], [0], [0], [1], [0, 0, 1, 1], [], []>} : vector<256x256xf32>, vector<256x16xf32>, vector<256x16xf32> -> vector<256x16xf32>
    %c0_3 = arith.constant 0 : index
    %c0_4 = arith.constant 0 : index
    %3 = vector.load %arg3[%c0_3, %c0_4] : memref<256x16xf32, #tpu.memory_space<vmem>>, vector<256x16xf32>
    tpu.vector_store %arg3[%c0_3, %c0_4], %2 {strides = array<i32>} : memref<256x16xf32, #tpu.memory_space<vmem>>, vector<256x16xf32>,
    return
  }
  func.func @transform_0(%arg0: i32) -> (i32, i32) {
    %c0_i32 = arith.constant 0 : i32
    %c0_i32_0 = arith.constant 0 : i32
    return %arg0, %c0_i32 : i32, i32
  }
  func.func @transform_1(%arg0: i32) -> (i32, i32) {
    %c0_i32 = arith.constant 0 : i32
    %c0_i32_0 = arith.constant 0 : i32
    %c0_i32_1 = arith.constant 0 : i32
    return %c0_i32, %c0_i32_0 : i32, i32
  }
  func.func @transform_2(%arg0: i32) -> (i32, i32) {
    %c0_i32 = arith.constant 0 : i32
    %c0_i32_0 = arith.constant 0 : i32
    return %arg0, %c0_i32 : i32, i32
  }
}

module attributes {stable_mosaic.version = 11 : i64} {
  func.func @_fused_attention_kernel(%arg0: i32, %arg1: i32, %arg2: memref<1x128x32xf32, #tpu.memory_space<vmem>>, %arg3: memref<1x128x32xf32, #tpu.memory_space<vmem>>, %arg4: memref<32x32xf32, #tpu.memory_space<vmem>>, %arg5: memref<1x32xf32, #tpu.memory_space<vmem>>, %arg6: memref<32x32xf32, #tpu.memory_space<vmem>>, %arg7: memref<1x32xf32, #tpu.memory_space<vmem>>, %arg8: memref<32x32xf32, #tpu.memory_space<vmem>>, %arg9: memref<1x32xf32, #tpu.memory_space<vmem>>, %arg10: memref<1x32xf32, #tpu.memory_space<vmem>>, %arg11: memref<1x128x32xf32, #tpu.memory_space<vmem>>, %arg12: memref<1x128x128xf32, #tpu.memory_space<vmem>>, %arg13: memref<128x32xf32, #tpu.memory_space<vmem>>, %arg14: memref<128x32xf32, #tpu.memory_space<vmem>>) attributes {dimension_semantics = [#tpu.dimension_semantics<parallel>, #tpu.dimension_semantics<arbitrary>], iteration_bounds = array<i64: 2, 1>, scalar_prefetch = 0 : i64, scratch_operands = 2 : i64, tpu.core_type = #tpu.core_type<tc>, window_params = [{transform_indices = @transform_0, window_bounds = array<i64: 1, 128, 32>}, {transform_indices = @transform_1, window_bounds = array<i64: 1, 128, 32>}, {pipeline_mode = #tpu.pipeline_mode<synchronous>, transform_indices = @transform_2, window_bounds = array<i64: 32, 32>}, {pipeline_mode = #tpu.pipeline_mode<synchronous>, transform_indices = @transform_3, window_bounds = array<i64: 1, 32>}, {pipeline_mode = #tpu.pipeline_mode<synchronous>, transform_indices = @transform_4, window_bounds = array<i64: 32, 32>}, {pipeline_mode = #tpu.pipeline_mode<synchronous>, transform_indices = @transform_5, window_bounds = array<i64: 1, 32>}, {pipeline_mode = #tpu.pipeline_mode<synchronous>, transform_indices = @transform_6, window_bounds = array<i64: 32, 32>}, {pipeline_mode = #tpu.pipeline_mode<synchronous>, transform_indices = @transform_7, window_bounds = array<i64: 1, 32>}, {pipeline_mode = #tpu.pipeline_mode<synchronous>, transform_indices = @transform_8, window_bounds = array<i64: 1, 32>}, {transform_indices = @transform_9, window_bounds = array<i64: 1, 128, 32>}, {transform_indices = @transform_10, window_bounds = array<i64: 1, 128, 128>}]} {
    %c0_i32 = arith.constant 0 : i32
    %0 = arith.cmpi eq, %arg1, %c0_i32 : i32
    %1 = arith.extui %0 : i1 to i32
    %c0_i32_0 = arith.constant 0 : i32
    %2 = arith.cmpi ne, %1, %c0_i32_0 : i32
    scf.if %2 {
      %c0_22 = arith.constant 0 : index
      %c0_23 = arith.constant 0 : index
      %c0_24 = arith.constant 0 : index
      %36 = vector.load %arg2[%c0_22, %c0_23, %c0_24] : memref<1x128x32xf32, #tpu.memory_space<vmem>>, vector<1x128x32xf32>
      %37 = vector.shape_cast %36 : vector<1x128x32xf32> to vector<128x32xf32>
      %c0_25 = arith.constant 0 : index
      %c0_26 = arith.constant 0 : index
      %38 = vector.load %arg6[%c0_25, %c0_26] : memref<32x32xf32, #tpu.memory_space<vmem>>, vector<32x32xf32>
      %cst_27 = arith.constant dense<0.000000e+00> : vector<128x32xf32>
      %39 = tpu.matmul %37, %38, %cst_27 {dimension_numbers = #tpu.dot_dimension_numbers<[1], [0], [0], [1], [0, 0, 1, 1], [], []>} : vector<128x32xf32>, vector<32x32xf32>, vector<128x32xf32> -> vector<128x32xf32>
      %c0_28 = arith.constant 0 : index
      %c0_29 = arith.constant 0 : index
      %40 = vector.load %arg7[%c0_28, %c0_29] : memref<1x32xf32, #tpu.memory_space<vmem>>, vector<1x32xf32>
      %41 = vector.broadcast %40 : vector<1x32xf32> to vector<128x32xf32>
      %42 = arith.addf %39, %41 : vector<128x32xf32>
      %c0_30 = arith.constant 0 : index
      %c0_31 = arith.constant 0 : index
      %43 = vector.load %arg13[%c0_30, %c0_31] : memref<128x32xf32, #tpu.memory_space<vmem>>, vector<128x32xf32>
      tpu.vector_store %arg13[%c0_30, %c0_31], %42 {strides = array<i32>} : memref<128x32xf32, #tpu.memory_space<vmem>>, vector<128x32xf32>,
      %c0_32 = arith.constant 0 : index
      %c0_33 = arith.constant 0 : index
      %c0_34 = arith.constant 0 : index
      %44 = vector.load %arg3[%c0_32, %c0_33, %c0_34] : memref<1x128x32xf32, #tpu.memory_space<vmem>>, vector<1x128x32xf32>
      %45 = vector.shape_cast %44 : vector<1x128x32xf32> to vector<128x32xf32>
      %c0_35 = arith.constant 0 : index
      %c0_36 = arith.constant 0 : index
      %46 = vector.load %arg8[%c0_35, %c0_36] : memref<32x32xf32, #tpu.memory_space<vmem>>, vector<32x32xf32>
      %cst_37 = arith.constant dense<0.000000e+00> : vector<128x32xf32>
      %47 = tpu.matmul %45, %46, %cst_37 {dimension_numbers = #tpu.dot_dimension_numbers<[1], [0], [0], [1], [0, 0, 1, 1], [], []>} : vector<128x32xf32>, vector<32x32xf32>, vector<128x32xf32> -> vector<128x32xf32>
      %c0_38 = arith.constant 0 : index
      %c0_39 = arith.constant 0 : index
      %48 = vector.load %arg9[%c0_38, %c0_39] : memref<1x32xf32, #tpu.memory_space<vmem>>, vector<1x32xf32>
      %49 = vector.broadcast %48 : vector<1x32xf32> to vector<128x32xf32>
      %50 = arith.addf %47, %49 : vector<128x32xf32>
      %c0_40 = arith.constant 0 : index
      %c0_41 = arith.constant 0 : index
      %51 = vector.load %arg14[%c0_40, %c0_41] : memref<128x32xf32, #tpu.memory_space<vmem>>, vector<128x32xf32>
      tpu.vector_store %arg14[%c0_40, %c0_41], %50 {strides = array<i32>} : memref<128x32xf32, #tpu.memory_space<vmem>>, vector<128x32xf32>,
    } else {
    }
    %c128_i32 = arith.constant 128 : i32
    %3 = arith.muli %arg1, %c128_i32 : i32
    %4 = tpu.assume_multiple %3, 128 : i32
    %c0 = arith.constant 0 : index
    %5 = arith.index_cast %4 : i32 to index
    %c0_1 = arith.constant 0 : index
    %6 = vector.load %arg2[%c0, %5, %c0_1] : memref<1x128x32xf32, #tpu.memory_space<vmem>>, vector<1x128x32xf32>
    %7 = vector.shape_cast %6 : vector<1x128x32xf32> to vector<128x32xf32>
    %c0_2 = arith.constant 0 : index
    %c0_3 = arith.constant 0 : index
    %8 = vector.load %arg4[%c0_2, %c0_3] : memref<32x32xf32, #tpu.memory_space<vmem>>, vector<32x32xf32>
    %cst = arith.constant dense<0.000000e+00> : vector<128x32xf32>
    %9 = tpu.matmul %7, %8, %cst {dimension_numbers = #tpu.dot_dimension_numbers<[1], [0], [0], [1], [0, 0, 1, 1], [], []>} : vector<128x32xf32>, vector<32x32xf32>, vector<128x32xf32> -> vector<128x32xf32>
    %c0_4 = arith.constant 0 : index
    %c0_5 = arith.constant 0 : index
    %10 = vector.load %arg5[%c0_4, %c0_5] : memref<1x32xf32, #tpu.memory_space<vmem>>, vector<1x32xf32>
    %11 = vector.broadcast %10 : vector<1x32xf32> to vector<128x32xf32>
    %12 = arith.addf %9, %11 : vector<128x32xf32>
    %c0_6 = arith.constant 0 : index
    %c0_7 = arith.constant 0 : index
    %13 = vector.load %arg13[%c0_6, %c0_7] : memref<128x32xf32, #tpu.memory_space<vmem>>, vector<128x32xf32>
    %cst_8 = arith.constant dense<0.000000e+00> : vector<128x128xf32>
    %14 = tpu.matmul %12, %13, %cst_8 {dimension_numbers = #tpu.dot_dimension_numbers<[1], [1], [0], [0], [0, 0, 1, 0], [], []>} : vector<128x32xf32>, vector<128x32xf32>, vector<128x128xf32> -> vector<128x128xf32>
    %cst_9 = arith.constant dense<0xFF800000> : vector<128xf32>
    %15 = vector.multi_reduction <maximumf>, %14, %cst_9 [1] : vector<128x128xf32> to vector<128xf32>
    %16 = vector.shape_cast %15 : vector<128xf32> to vector<128x1xf32>
    %17 = vector.broadcast %16 : vector<128x1xf32> to vector<128x128xf32>
    %18 = arith.subf %14, %17 : vector<128x128xf32>
    %19 = math.exp %18 : vector<128x128xf32>
    %cst_10 = arith.constant dense<0.000000e+00> : vector<128xf32>
    %20 = vector.multi_reduction <add>, %19, %cst_10 [1] : vector<128x128xf32> to vector<128xf32>
    %21 = vector.shape_cast %20 : vector<128xf32> to vector<128x1xf32>
    %22 = tpu.reciprocal %21 : vector<128x1xf32> -> vector<128x1xf32>
    %23 = vector.broadcast %22 : vector<128x1xf32> to vector<128x128xf32>
    %24 = arith.mulf %19, %23 : vector<128x128xf32>
    %c0_11 = arith.constant 0 : index
    %c0_12 = arith.constant 0 : index
    %c0_13 = arith.constant 0 : index
    %25 = vector.load %arg12[%c0_11, %c0_12, %c0_13] : memref<1x128x128xf32, #tpu.memory_space<vmem>>, vector<1x128x128xf32>
    %26 = vector.shape_cast %25 : vector<1x128x128xf32> to vector<128x128xf32>
    %27 = vector.shape_cast %24 : vector<128x128xf32> to vector<1x128x128xf32>
    tpu.vector_store %arg12[%c0_11, %c0_12, %c0_13], %27 {strides = array<i32>} : memref<1x128x128xf32, #tpu.memory_space<vmem>>, vector<1x128x128xf32>,
    %c0_14 = arith.constant 0 : index
    %c0_15 = arith.constant 0 : index
    %28 = vector.load %arg14[%c0_14, %c0_15] : memref<128x32xf32, #tpu.memory_space<vmem>>, vector<128x32xf32>
    %cst_16 = arith.constant dense<0.000000e+00> : vector<128x32xf32>
    %29 = tpu.matmul %24, %28, %cst_16 {dimension_numbers = #tpu.dot_dimension_numbers<[1], [0], [0], [1], [0, 0, 1, 1], [], []>} : vector<128x128xf32>, vector<128x32xf32>, vector<128x32xf32> -> vector<128x32xf32>
    %c0_17 = arith.constant 0 : index
    %c0_18 = arith.constant 0 : index
    %30 = vector.load %arg10[%c0_17, %c0_18] : memref<1x32xf32, #tpu.memory_space<vmem>>, vector<1x32xf32>
    %31 = vector.broadcast %30 : vector<1x32xf32> to vector<128x32xf32>
    %32 = arith.addf %29, %31 : vector<128x32xf32>
    %c0_19 = arith.constant 0 : index
    %c0_20 = arith.constant 0 : index
    %c0_21 = arith.constant 0 : index
    %33 = vector.load %arg11[%c0_19, %c0_20, %c0_21] : memref<1x128x32xf32, #tpu.memory_space<vmem>>, vector<1x128x32xf32>
    %34 = vector.shape_cast %33 : vector<1x128x32xf32> to vector<128x32xf32>
    %35 = vector.shape_cast %32 : vector<128x32xf32> to vector<1x128x32xf32>
    tpu.vector_store %arg11[%c0_19, %c0_20, %c0_21], %35 {strides = array<i32>} : memref<1x128x32xf32, #tpu.memory_space<vmem>>, vector<1x128x32xf32>,
    return
  }
  func.func @transform_0(%arg0: i32, %arg1: i32) -> (i32, i32, i32) {
    %c0_i32 = arith.constant 0 : i32
    %c0_i32_0 = arith.constant 0 : i32
    %c0_i32_1 = arith.constant 0 : i32
    return %arg0, %c0_i32, %c0_i32_0 : i32, i32, i32
  }
  func.func @transform_1(%arg0: i32, %arg1: i32) -> (i32, i32, i32) {
    %c0_i32 = arith.constant 0 : i32
    %c0_i32_0 = arith.constant 0 : i32
    %c0_i32_1 = arith.constant 0 : i32
    return %arg0, %c0_i32, %c0_i32_0 : i32, i32, i32
  }
  func.func @transform_2(%arg0: i32, %arg1: i32) -> (i32, i32) {
    %c0_i32 = arith.constant 0 : i32
    %c0_i32_0 = arith.constant 0 : i32
    %c0_i32_1 = arith.constant 0 : i32
    return %c0_i32, %c0_i32_0 : i32, i32
  }
  func.func @transform_3(%arg0: i32, %arg1: i32) -> (i32, i32) {
    %c0_i32 = arith.constant 0 : i32
    %c0_i32_0 = arith.constant 0 : i32
    %c0_i32_1 = arith.constant 0 : i32
    return %c0_i32, %c0_i32_0 : i32, i32
  }
  func.func @transform_4(%arg0: i32, %arg1: i32) -> (i32, i32) {
    %c0_i32 = arith.constant 0 : i32
    %c0_i32_0 = arith.constant 0 : i32
    %c0_i32_1 = arith.constant 0 : i32
    return %c0_i32, %c0_i32_0 : i32, i32
  }
  func.func @transform_5(%arg0: i32, %arg1: i32) -> (i32, i32) {
    %c0_i32 = arith.constant 0 : i32
    %c0_i32_0 = arith.constant 0 : i32
    %c0_i32_1 = arith.constant 0 : i32
    return %c0_i32, %c0_i32_0 : i32, i32
  }
  func.func @transform_6(%arg0: i32, %arg1: i32) -> (i32, i32) {
    %c0_i32 = arith.constant 0 : i32
    %c0_i32_0 = arith.constant 0 : i32
    %c0_i32_1 = arith.constant 0 : i32
    return %c0_i32, %c0_i32_0 : i32, i32
  }
  func.func @transform_7(%arg0: i32, %arg1: i32) -> (i32, i32) {
    %c0_i32 = arith.constant 0 : i32
    %c0_i32_0 = arith.constant 0 : i32
    %c0_i32_1 = arith.constant 0 : i32
    return %c0_i32, %c0_i32_0 : i32, i32
  }
  func.func @transform_8(%arg0: i32, %arg1: i32) -> (i32, i32) {
    %c0_i32 = arith.constant 0 : i32
    %c0_i32_0 = arith.constant 0 : i32
    %c0_i32_1 = arith.constant 0 : i32
    return %c0_i32, %c0_i32_0 : i32, i32
  }
  func.func @transform_9(%arg0: i32, %arg1: i32) -> (i32, i32, i32) {
    %c0_i32 = arith.constant 0 : i32
    %c0_i32_0 = arith.constant 0 : i32
    return %arg0, %arg1, %c0_i32 : i32, i32, i32
  }
  func.func @transform_10(%arg0: i32, %arg1: i32) -> (i32, i32, i32) {
    %c0_i32 = arith.constant 0 : i32
    %c0_i32_0 = arith.constant 0 : i32
    return %arg0, %arg1, %c0_i32 : i32, i32, i32
  }
}

</mosaic_0001>

<llo_original>
// kernel: attention_block_forward.2
$region0: #{attention_block_forward.2}
  #allocation0 [shape = 'u32[]', space=smem, size = 0x4, offset = 0x4, fixed_abs, tag = 'smem constant byte address 0x4 - core index']
  #allocation1 [shape = 'u32[144,128]{1,0:T(1,128)}', space=vmem, size = 0x12000, scoped, tag = 'internal scratch']
  %s0 = inlined_call_operand.vmem [shape: f32[512,256], index: 0, kind: input, shape index: {}]
  %s1 = inlined_call_operand.vmem [shape: f32[256,16], index: 1, kind: input, shape index: {}]
  %s2 = inlined_call_operand.vmem [shape: f32[512,16], index: 2, kind: output, shape index: {}]
  %s3 = sld [smem:[#allocation0]]
  $region41: #{attention_block_forward.2} parent=0
    _
  %s5 = ssub.s32 1, %s3
  %s6 = scalar_select 0, %s5, %s3
  loop: start=0, step=1, limit=4
  $region2: #{attention_block_forward.2} parent=0 // loop_pre_header
    _
  $region3: #{attention_block_forward.2} parent=0 // loop_header
    %s8 = sphi 0, %s12
    %p9 = scmp.ge.s32.totalorder %s8, 4
    %s18 = sphi 0, %s20
    %s21 = sphi 0, %s18
    %s22 = sphi 0, %s21
    %s38 = sphi 0, %s22
    %s42 = sphi 0, %s42
    %s44 = sphi 0, %s42
    %s45 = sphi 0, %s44
    %s59 = sphi 0, %s45
    %s65 = sphi 0, %s67
    %s68 = sphi 0, %s65
    %s69 = sphi 0, %s68
    %s85 = sphi 0, %s69
  $region4: #{attention_block_forward.2} parent=0 // loop_header_branch
    %11 = sbr.rel (%p9) target = $region8
  $region5: #{attention_block_forward.2} parent=0 // loop_body
    %s13 = ssub.s32 %s8, 1
    %s14 = ssub.s32 %s8, 2
    %s15 = sadd.s32 %s8, 1
    %s16 = ssub.s32 %s8, %s15
    %p17 = scmp.eq.s32.totalorder %s16, 0
    %s19 = sadd.s32 %s18, 1
    %s20 = scalar_select %p17, %s18, %s19
    %p23 = pneg %p17
    %p24 = scmp.eq.s32.totalorder %s8, 1
    %p25 = por %p23, %p24
    %p26 = scmp.ne.s32.totalorder %s18, %s21
    %p27 = scmp.eq.s32.totalorder %s8, 0
    %p28 = por %p26, %p27
    %p29 = scmp.ne.s32.totalorder %s18, %s21
    %p30 = scmp.eq.s32.totalorder %s13, 1
    %p31 = por %p29, %p30
    %p32 = scmp.ne.s32.totalorder %s21, %s22
    %p33 = scmp.eq.s32.totalorder %s13, 0
    %p34 = por %p32, %p33
    %p35 = scmp.ne.s32.totalorder %s21, %s22
    %p36 = scmp.eq.s32.totalorder %s14, 1
    %p37 = por %p35, %p36
    %p39 = scmp.ne.s32.totalorder %s22, %s38
    %p40 = scmp.eq.s32.totalorder %s14, 0
    %p41 = por %p39, %p40
    %s43 = sadd.s32 %s42, 1
    %p46 = scmp.eq.s32.totalorder %s8, 1
    %p47 = scmp.ne.s32.totalorder %s42, %s44
    %p48 = scmp.eq.s32.totalorder %s8, 0
    %p49 = por %p47, %p48
    %p50 = scmp.ne.s32.totalorder %s42, %s44
    %p51 = scmp.eq.s32.totalorder %s13, 1
    %p52 = por %p50, %p51
    %p53 = scmp.ne.s32.totalorder %s44, %s45
    %p54 = scmp.eq.s32.totalorder %s13, 0
    %p55 = por %p53, %p54
    %p56 = scmp.ne.s32.totalorder %s44, %s45
    %p57 = scmp.eq.s32.totalorder %s14, 1
    %p58 = por %p56, %p57
    %p60 = scmp.ne.s32.totalorder %s45, %s59
    %p61 = scmp.eq.s32.totalorder %s14, 0
    %p62 = por %p60, %p61
    %s63 = ssub.s32 %s8, %s15
    %p64 = scmp.eq.s32.totalorder %s63, 0
    %s66 = sadd.s32 %s65, 1
    %s67 = scalar_select %p64, %s65, %s66
    %p70 = pneg %p64
    %p71 = scmp.eq.s32.totalorder %s8, 1
    %p72 = por %p70, %p71
    %p73 = scmp.ne.s32.totalorder %s65, %s68
    %p74 = scmp.eq.s32.totalorder %s8, 0
    %p75 = por %p73, %p74
    %p76 = scmp.ne.s32.totalorder %s65, %s68
    %p77 = scmp.eq.s32.totalorder %s13, 1
    %p78 = por %p76, %p77
    %p79 = scmp.ne.s32.totalorder %s68, %s69
    %p80 = scmp.eq.s32.totalorder %s13, 0
    %p81 = por %p79, %p80
    %p82 = scmp.ne.s32.totalorder %s68, %s69
    %p83 = scmp.eq.s32.totalorder %s14, 1
    %p84 = por %p82, %p83
    %p86 = scmp.ne.s32.totalorder %s69, %s85
    %p87 = scmp.eq.s32.totalorder %s14, 0
    %p88 = por %p86, %p87
    %p89 = scmp.le.s32.totalorder 1, %s8
    %p90 = scmp.lt.s32.totalorder %s8, 3
    %p91 = pnand %p89, %p90
    %p92 = pneg %p91
    // Predicated region
    $region9: #{attention_block_forward.2} parent=5 // pred_check
      _
    $region10: #{attention_block_forward.2} parent=5 // pred_check_branch
      %94 = sbr.rel (%p91) target = $region12
    $region11: #{attention_block_forward.2} parent=5 // pred_region
      %s95 = ssub.s32 %s8, 1
      // Predicated region
      $region13: #{attention_block_forward.2} parent=11 // pred_check
        %p96 = pneg %p55
      $region14: #{attention_block_forward.2} parent=11 // pred_check_branch
        %98 = sbr.rel (%p96) target = $region16
      $region15: #{attention_block_forward.2} parent=11 // pred_region
        _
      $region16: #{attention_block_forward.2} parent=11 // pred_fallthru
        _
    $region12: #{attention_block_forward.2} parent=5 // pred_fallthru
      _
    %p99 = scmp.lt.s32.totalorder %s8, 2
    // Predicated region
    $region17: #{attention_block_forward.2} parent=5 // pred_check
      %p100 = pneg %p99
    $region18: #{attention_block_forward.2} parent=5 // pred_check_branch
      %102 = sbr.rel (%p100) target = $region20
    $region19: #{attention_block_forward.2} parent=5 // pred_region
      // Predicated region
      $region21: #{attention_block_forward.2} parent=19 // pred_check
        %p103 = pneg %p28
      $region22: #{attention_block_forward.2} parent=19 // pred_check_branch
        %105 = sbr.rel (%p103) target = $region24
      $region23: #{attention_block_forward.2} parent=19 // pred_region
        %s106 = smul.u32 32, %s8
        %p107 = scmp.lt.s32.totalorder %s106, 63
        %s108 = scalar_select %p107, %s106, 63
        %s109 = smul.addr %s108, 2
        %s110 = smul.addr %s109, 8
        %s111 = scalar_lea.vmem %s0, %s110
        %s112 = smul.u32 32, %s8
      $region24: #{attention_block_forward.2} parent=19 // pred_fallthru
        _
    $region20: #{attention_block_forward.2} parent=5 // pred_fallthru
      _
    %p113 = scmp.le.s32.totalorder 1, %s8
    %p114 = scmp.lt.s32.totalorder %s8, 3
    %p115 = pnand %p113, %p114
    %p116 = pneg %p115
    // Predicated region
    $region25: #{attention_block_forward.2} parent=5 // pred_check
      _
    $region26: #{attention_block_forward.2} parent=5 // pred_check_branch
      %118 = sbr.rel (%p115) target = $region28
    $region27: #{attention_block_forward.2} parent=5 // pred_region
      %s119 = ssub.s32 %s8, 1
      %s120 = smul.u32 32, %s13
      %p121 = scmp.lt.s32.totalorder %s120, 63
      %s122 = scalar_select %p121, %s120, 63
      %s123 = smul.addr %s122, 2
      %s124 = smul.addr %s123, 8
      %s125 = scalar_lea.vmem %s0, %s124
      %p126 = pneg %p34
      %p127 = pneg %p31
      %p128 = pneg %p55
      %p129 = pneg %p52
      %p130 = pneg %p81
      %p131 = pneg %p78
      %s132 = smul.u32 32, %s13
      %p133 = scmp.lt.s32.totalorder %s132, 63
      %s134 = scalar_select %p133, %s132, 63
      %s135 = smul.addr %s134, 8
      %s136 = scalar_lea.vmem %s2, %s135
      %s137 = smul.u32 32, %s13
      %p138 = scmp.lt.s32.totalorder %s137, 63
      %s139 = scalar_select %p138, %s137, 63
      %s140 = smul.addr %s139, 2
      %s141 = smul.addr %s140, 8
      %s142 = scalar_lea.vmem %s0, %s141
      %s143 = smul.u32 32, %s13
      %s144 = smul.u32 32, %s13
      %p145 = scmp.lt.s32.totalorder %s144, 63
      %s146 = scalar_select %p145, %s144, 63
      %s147 = smul.addr %s146, 8
      %s148 = scalar_lea.vmem %s2, %s147
      %s149 = smul.u32 32, %s13
      %v150 = vld [vmem:[%s142] sm:$0xff]
      %v151 = vld [vmem:[%s142 + $0x8] sm:$0xff]
      %v152 = vld [vmem:[%s142 + $0x10] sm:$0xff]
      %v153 = vld [vmem:[%s142 + $0x18] sm:$0xff]
      %v154 = vld [vmem:[%s142 + $0x20] sm:$0xff]
      %v155 = vld [vmem:[%s142 + $0x28] sm:$0xff]
      %v156 = vld [vmem:[%s142 + $0x30] sm:$0xff]
      %v157 = vld [vmem:[%s142 + $0x38] sm:$0xff]
      %v158 = vld [vmem:[%s142 + $0x40] sm:$0xff]
      %v159 = vld [vmem:[%s142 + $0x48] sm:$0xff]
      %v160 = vld [vmem:[%s142 + $0x50] sm:$0xff]
      %v161 = vld [vmem:[%s142 + $0x58] sm:$0xff]
      %v162 = vld [vmem:[%s142 + $0x60] sm:$0xff]
      %v163 = vld [vmem:[%s142 + $0x68] sm:$0xff]
      %v164 = vld [vmem:[%s142 + $0x70] sm:$0xff]
      %v165 = vld [vmem:[%s142 + $0x78] sm:$0xff]
      %v166 = vld [vmem:[%s142 + $0x80] sm:$0xff]
      %v167 = vld [vmem:[%s142 + $0x88] sm:$0xff]
      %v168 = vld [vmem:[%s142 + $0x90] sm:$0xff]
      %v169 = vld [vmem:[%s142 + $0x98] sm:$0xff]
      %v170 = vld [vmem:[%s142 + $0xa0] sm:$0xff]
      %v171 = vld [vmem:[%s142 + $0xa8] sm:$0xff]
      %v172 = vld [vmem:[%s142 + $0xb0] sm:$0xff]
      %v173 = vld [vmem:[%s142 + $0xb8] sm:$0xff]
      %v174 = vld [vmem:[%s142 + $0xc0] sm:$0xff]
      %v175 = vld [vmem:[%s142 + $0xc8] sm:$0xff]
      %v176 = vld [vmem:[%s142 + $0xd0] sm:$0xff]
      %v177 = vld [vmem:[%s142 + $0xd8] sm:$0xff]
      %v178 = vld [vmem:[%s142 + $0xe0] sm:$0xff]
      %v179 = vld [vmem:[%s142 + $0xe8] sm:$0xff]
      %v180 = vld [vmem:[%s142 + $0xf0] sm:$0xff]
      %v181 = vld [vmem:[%s142 + $0xf8] sm:$0xff]
      %v182 = vld [vmem:[%s142 + $0x100] sm:$0xff]
      %v183 = vld [vmem:[%s142 + $0x108] sm:$0xff]
      %v184 = vld [vmem:[%s142 + $0x110] sm:$0xff]
      %v185 = vld [vmem:[%s142 + $0x118] sm:$0xff]
      %v186 = vld [vmem:[%s142 + $0x120] sm:$0xff]
      %v187 = vld [vmem:[%s142 + $0x128] sm:$0xff]
      %v188 = vld [vmem:[%s142 + $0x130] sm:$0xff]
      %v189 = vld [vmem:[%s142 + $0x138] sm:$0xff]
      %v190 = vld [vmem:[%s142 + $0x140] sm:$0xff]
      %v191 = vld [vmem:[%s142 + $0x148] sm:$0xff]
      %v192 = vld [vmem:[%s142 + $0x150] sm:$0xff]
      %v193 = vld [vmem:[%s142 + $0x158] sm:$0xff]
      %v194 = vld [vmem:[%s142 + $0x160] sm:$0xff]
      %v195 = vld [vmem:[%s142 + $0x168] sm:$0xff]
      %v196 = vld [vmem:[%s142 + $0x170] sm:$0xff]
      %v197 = vld [vmem:[%s142 + $0x178] sm:$0xff]
      %v198 = vld [vmem:[%s142 + $0x180] sm:$0xff]
      %v199 = vld [vmem:[%s142 + $0x188] sm:$0xff]
      %v200 = vld [vmem:[%s142 + $0x190] sm:$0xff]
      %v201 = vld [vmem:[%s142 + $0x198] sm:$0xff]
      %v202 = vld [vmem:[%s142 + $0x1a0] sm:$0xff]
      %v203 = vld [vmem:[%s142 + $0x1a8] sm:$0xff]
      %v204 = vld [vmem:[%s142 + $0x1b0] sm:$0xff]
      %v205 = vld [vmem:[%s142 + $0x1b8] sm:$0xff]
      %v206 = vld [vmem:[%s142 + $0x1c0] sm:$0xff]
      %v207 = vld [vmem:[%s142 + $0x1c8] sm:$0xff]
      %v208 = vld [vmem:[%s142 + $0x1d0] sm:$0xff]
      %v209 = vld [vmem:[%s142 + $0x1d8] sm:$0xff]
      %v210 = vld [vmem:[%s142 + $0x1e0] sm:$0xff]
      %v211 = vld [vmem:[%s142 + $0x1e8] sm:$0xff]
      %v212 = vld [vmem:[%s142 + $0x1f0] sm:$0xff]
      %v213 = vld [vmem:[%s142 + $0x1f8] sm:$0xff]
      %v214 = vld [vmem:[%s1] sm:$0xff]
      %v215 = vld [vmem:[%s1 + $0x8] sm:$0xff]
      %v216 = vld [vmem:[%s1 + $0x10] sm:$0xff]
      %v217 = vld [vmem:[%s1 + $0x18] sm:$0xff]
      %v218 = vld [vmem:[%s1 + $0x20] sm:$0xff]
      %v219 = vld [vmem:[%s1 + $0x28] sm:$0xff]
      %v220 = vld [vmem:[%s1 + $0x30] sm:$0xff]
      %v221 = vld [vmem:[%s1 + $0x38] sm:$0xff]
      %v222 = vld [vmem:[%s1 + $0x40] sm:$0xff]
      %v223 = vld [vmem:[%s1 + $0x48] sm:$0xff]
      %v224 = vld [vmem:[%s1 + $0x50] sm:$0xff]
      %v225 = vld [vmem:[%s1 + $0x58] sm:$0xff]
      %v226 = vld [vmem:[%s1 + $0x60] sm:$0xff]
      %v227 = vld [vmem:[%s1 + $0x68] sm:$0xff]
      %v228 = vld [vmem:[%s1 + $0x70] sm:$0xff]
      %v229 = vld [vmem:[%s1 + $0x78] sm:$0xff]
      %v230 = vld [vmem:[%s1 + $0x80] sm:$0xff]
      %v231 = vld [vmem:[%s1 + $0x88] sm:$0xff]
      %v232 = vld [vmem:[%s1 + $0x90] sm:$0xff]
      %v233 = vld [vmem:[%s1 + $0x98] sm:$0xff]
      %v234 = vld [vmem:[%s1 + $0xa0] sm:$0xff]
      %v235 = vld [vmem:[%s1 + $0xa8] sm:$0xff]
      %v236 = vld [vmem:[%s1 + $0xb0] sm:$0xff]
      %v237 = vld [vmem:[%s1 + $0xb8] sm:$0xff]
      %v238 = vld [vmem:[%s1 + $0xc0] sm:$0xff]
      %v239 = vld [vmem:[%s1 + $0xc8] sm:$0xff]
      %v240 = vld [vmem:[%s1 + $0xd0] sm:$0xff]
      %v241 = vld [vmem:[%s1 + $0xd8] sm:$0xff]
      %v242 = vld [vmem:[%s1 + $0xe0] sm:$0xff]
      %v243 = vld [vmem:[%s1 + $0xe8] sm:$0xff]
      %v244 = vld [vmem:[%s1 + $0xf0] sm:$0xff]
      %v245 = vld [vmem:[%s1 + $0xf8] sm:$0xff]
      %246 = vmatprep.subr.mxu0 0.0
      %247 = vmatpush1.msra.mxu0 %v214
      %248 = vmatprep.subr.mxu0 0.0
      %249 = vmatpush1.msra.mxu0 %v215
      %250 = vmatprep.subr.mxu0 0.0
      %251 = vmatpush1.msra.mxu0 %v216
      %252 = vmatprep.subr.mxu0 0.0
      %253 = vmatpush1.msra.mxu0 %v217
      %254 = vmatprep.subr.mxu0 0.0
      %255 = vmatpush1.msra.mxu0 %v218
      %256 = vmatprep.subr.mxu0 0.0
      %257 = vmatpush1.msra.mxu0 %v219
      %258 = vmatprep.subr.mxu0 0.0
      %259 = vmatpush1.msra.mxu0 %v220
      %260 = vmatprep.subr.mxu0 0.0
      %261 = vmatpush1.msra.mxu0 %v221
      %262 = vmatprep.subr.mxu0 0.0
      %263 = vmatpush1.msra.mxu0 %v222
      %264 = vmatprep.subr.mxu0 0.0
      %265 = vmatpush1.msra.mxu0 %v223
      %266 = vmatprep.subr.mxu0 0.0
      %267 = vmatpush1.msra.mxu0 %v224
      %268 = vmatprep.subr.mxu0 0.0
      %269 = vmatpush1.msra.mxu0 %v225
      %270 = vmatprep.subr.mxu0 0.0
      %271 = vmatpush1.msra.mxu0 %v226
      %272 = vmatprep.subr.mxu0 0.0
      %273 = vmatpush1.msra.mxu0 %v227
      %274 = vmatprep.subr.mxu0 0.0
      %275 = vmatpush1.msra.mxu0 %v228
      %276 = vmatprep.subr.mxu0 0.0
      %277 = vmatpush1.msra.mxu0 %v229
      %278 = vmatprep.subr.mxu0 0.0
      %279 = vmatpush1.msra.mxu0 %v230
      %280 = vmatprep.subr.mxu0 0.0
      %281 = vmatpush1.msra.mxu0 %v231
      %282 = vmatprep.subr.mxu0 0.0
      %283 = vmatpush1.msra.mxu0 %v232
      %284 = vmatprep.subr.mxu0 0.0
      %285 = vmatpush1.msra.mxu0 %v233
      %286 = vmatprep.subr.mxu0 0.0
      %287 = vmatpush1.msra.mxu0 %v234
      %288 = vmatprep.subr.mxu0 0.0
      %289 = vmatpush1.msra.mxu0 %v235
      %290 = vmatprep.subr.mxu0 0.0
      %291 = vmatpush1.msra.mxu0 %v236
      %292 = vmatprep.subr.mxu0 0.0
      %293 = vmatpush1.msra.mxu0 %v237
      %294 = vmatprep.subr.mxu0 0.0
      %295 = vmatpush1.msra.mxu0 %v238
      %296 = vmatprep.subr.mxu0 0.0
      %297 = vmatpush1.msra.mxu0 %v239
      %298 = vmatprep.subr.mxu0 0.0
      %299 = vmatpush1.msra.mxu0 %v240
      %300 = vmatprep.subr.mxu0 0.0
      %301 = vmatpush1.msra.mxu0 %v241
      %302 = vmatprep.subr.mxu0 0.0
      %303 = vmatpush1.msra.mxu0 %v242
      %304 = vmatprep.subr.mxu0 0.0
      %305 = vmatpush1.msra.mxu0 %v243
      %306 = vmatprep.subr.mxu0 0.0
      %307 = vmatpush1.msra.mxu0 %v244
      %308 = vmatprep.subr.mxu0 0.0
      %309 = vmatpush1.msra.mxu0 %v245
      %310 = vmatprep.mubr.f32.mxu0 %v151
      %311 = vmatmul.mubr.f32.gmra.mrb[0].mxu0 %v150
      %v312 = vpop.f32.mrb[0].mxu0
      %v313 = vadd.f32 0.0, %v312
      %v314 = vpop.f32.mrb[0].mxu0
      %315 = vmatprep.mubr.f32.mxu0 %v153
      %316 = vmatmul.mubr.f32.gmra.mrb[0].mxu0 %v152
      %v317 = vpop.f32.mrb[0].mxu0
      %v318 = vadd.f32 0.0, %v317
      %v319 = vpop.f32.mrb[0].mxu0
      %320 = vmatprep.mubr.f32.mxu0 %v155
      %321 = vmatmul.mubr.f32.gmra.mrb[0].mxu0 %v154
      %v322 = vpop.f32.mrb[0].mxu0
      %v323 = vadd.f32 0.0, %v322
      %v324 = vpop.f32.mrb[0].mxu0
      %325 = vmatprep.mubr.f32.mxu0 %v157
      %326 = vmatmul.mubr.f32.gmra.mrb[0].mxu0 %v156
      %v327 = vpop.f32.mrb[0].mxu0
      %v328 = vadd.f32 0.0, %v327
      %v329 = vpop.f32.mrb[0].mxu0
      %330 = vmatprep.mubr.f32.mxu0 %v159
      %331 = vmatmul.mubr.f32.gmra.mrb[0].mxu0 %v158
      %v332 = vpop.f32.mrb[0].mxu0
      %v333 = vadd.f32 0.0, %v332
      %v334 = vpop.f32.mrb[0].mxu0
      %335 = vmatprep.mubr.f32.mxu0 %v161
      %336 = vmatmul.mubr.f32.gmra.mrb[0].mxu0 %v160
      %v337 = vpop.f32.mrb[0].mxu0
      %v338 = vadd.f32 0.0, %v337
      %v339 = vpop.f32.mrb[0].mxu0
      %340 = vmatprep.mubr.f32.mxu0 %v163
      %341 = vmatmul.mubr.f32.gmra.mrb[0].mxu0 %v162
      %v342 = vpop.f32.mrb[0].mxu0
      %v343 = vadd.f32 0.0, %v342
      %v344 = vpop.f32.mrb[0].mxu0
      %345 = vmatprep.mubr.f32.mxu0 %v165
      %346 = vmatmul.mubr.f32.gmra.mrb[0].mxu0 %v164
      %v347 = vpop.f32.mrb[0].mxu0
      %v348 = vadd.f32 0.0, %v347
      %v349 = vpop.f32.mrb[0].mxu0
      %350 = vmatprep.mubr.f32.mxu0 %v167
      %351 = vmatmul.mubr.f32.gmra.mrb[0].mxu0 %v166
      %v352 = vpop.f32.mrb[0].mxu0
      %v353 = vadd.f32 0.0, %v352
      %v354 = vpop.f32.mrb[0].mxu0
      %355 = vmatprep.mubr.f32.mxu0 %v169
      %356 = vmatmul.mubr.f32.gmra.mrb[0].mxu0 %v168
      %v357 = vpop.f32.mrb[0].mxu0
      %v358 = vadd.f32 0.0, %v357
      %v359 = vpop.f32.mrb[0].mxu0
      %360 = vmatprep.mubr.f32.mxu0 %v171
      %361 = vmatmul.mubr.f32.gmra.mrb[0].mxu0 %v170
      %v362 = vpop.f32.mrb[0].mxu0
      %v363 = vadd.f32 0.0, %v362
      %v364 = vpop.f32.mrb[0].mxu0
      %365 = vmatprep.mubr.f32.mxu0 %v173
      %366 = vmatmul.mubr.f32.gmra.mrb[0].mxu0 %v172
      %v367 = vpop.f32.mrb[0].mxu0
      %v368 = vadd.f32 0.0, %v367
      %v369 = vpop.f32.mrb[0].mxu0
      %370 = vmatprep.mubr.f32.mxu0 %v175
      %371 = vmatmul.mubr.f32.gmra.mrb[0].mxu0 %v174
      %v372 = vpop.f32.mrb[0].mxu0
      %v373 = vadd.f32 0.0, %v372
      %v374 = vpop.f32.mrb[0].mxu0
      %375 = vmatprep.mubr.f32.mxu0 %v177
      %376 = vmatmul.mubr.f32.gmra.mrb[0].mxu0 %v176
      %v377 = vpop.f32.mrb[0].mxu0
      %v378 = vadd.f32 0.0, %v377
      %v379 = vpop.f32.mrb[0].mxu0
      %380 = vmatprep.mubr.f32.mxu0 %v179
      %381 = vmatmul.mubr.f32.gmra.mrb[0].mxu0 %v178
      %v382 = vpop.f32.mrb[0].mxu0
      %v383 = vadd.f32 0.0, %v382
      %v384 = vpop.f32.mrb[0].mxu0
      %385 = vmatprep.mubr.f32.mxu0 %v181
      %386 = vmatmul.mubr.f32.gmra.mrb[0].mxu0 %v180
      %v387 = vpop.f32.mrb[0].mxu0
      %v388 = vadd.f32 0.0, %v387
      %v389 = vpop.f32.mrb[0].mxu0
      %390 = vmatprep.mubr.f32.mxu0 %v183
      %391 = vmatmul.mubr.f32.gmra.mrb[0].mxu0 %v182
      %v392 = vpop.f32.mrb[0].mxu0
      %v393 = vadd.f32 0.0, %v392
      %v394 = vpop.f32.mrb[0].mxu0
      %395 = vmatprep.mubr.f32.mxu0 %v185
      %396 = vmatmul.mubr.f32.gmra.mrb[0].mxu0 %v184
      %v397 = vpop.f32.mrb[0].mxu0
      %v398 = vadd.f32 0.0, %v397
      %v399 = vpop.f32.mrb[0].mxu0
      %400 = vmatprep.mubr.f32.mxu0 %v187
      %401 = vmatmul.mubr.f32.gmra.mrb[0].mxu0 %v186
      %v402 = vpop.f32.mrb[0].mxu0
      %v403 = vadd.f32 0.0, %v402
      %v404 = vpop.f32.mrb[0].mxu0
      %405 = vmatprep.mubr.f32.mxu0 %v189
      %406 = vmatmul.mubr.f32.gmra.mrb[0].mxu0 %v188
      %v407 = vpop.f32.mrb[0].mxu0
      %v408 = vadd.f32 0.0, %v407
      %v409 = vpop.f32.mrb[0].mxu0
      %410 = vmatprep.mubr.f32.mxu0 %v191
      %411 = vmatmul.mubr.f32.gmra.mrb[0].mxu0 %v190
      %v412 = vpop.f32.mrb[0].mxu0
      %v413 = vadd.f32 0.0, %v412
      %v414 = vpop.f32.mrb[0].mxu0
      %415 = vmatprep.mubr.f32.mxu0 %v193
      %416 = vmatmul.mubr.f32.gmra.mrb[0].mxu0 %v192
      %v417 = vpop.f32.mrb[0].mxu0
      %v418 = vadd.f32 0.0, %v417
      %v419 = vpop.f32.mrb[0].mxu0
      %420 = vmatprep.mubr.f32.mxu0 %v195
      %421 = vmatmul.mubr.f32.gmra.mrb[0].mxu0 %v194
      %v422 = vpop.f32.mrb[0].mxu0
      %v423 = vadd.f32 0.0, %v422
      %v424 = vpop.f32.mrb[0].mxu0
      %425 = vmatprep.mubr.f32.mxu0 %v197
      %426 = vmatmul.mubr.f32.gmra.mrb[0].mxu0 %v196
      %v427 = vpop.f32.mrb[0].mxu0
      %v428 = vadd.f32 0.0, %v427
      %v429 = vpop.f32.mrb[0].mxu0
      %430 = vmatprep.mubr.f32.mxu0 %v199
      %431 = vmatmul.mubr.f32.gmra.mrb[0].mxu0 %v198
      %v432 = vpop.f32.mrb[0].mxu0
      %v433 = vadd.f32 0.0, %v432
      %v434 = vpop.f32.mrb[0].mxu0
      %435 = vmatprep.mubr.f32.mxu0 %v201
      %436 = vmatmul.mubr.f32.gmra.mrb[0].mxu0 %v200
      %v437 = vpop.f32.mrb[0].mxu0
      %v438 = vadd.f32 0.0, %v437
      %v439 = vpop.f32.mrb[0].mxu0
      %440 = vmatprep.mubr.f32.mxu0 %v203
      %441 = vmatmul.mubr.f32.gmra.mrb[0].mxu0 %v202
      %v442 = vpop.f32.mrb[0].mxu0
      %v443 = vadd.f32 0.0, %v442
      %v444 = vpop.f32.mrb[0].mxu0
      %445 = vmatprep.mubr.f32.mxu0 %v205
      %446 = vmatmul.mubr.f32.gmra.mrb[0].mxu0 %v204
      %v447 = vpop.f32.mrb[0].mxu0
      %v448 = vadd.f32 0.0, %v447
      %v449 = vpop.f32.mrb[0].mxu0
      %450 = vmatprep.mubr.f32.mxu0 %v207
      %451 = vmatmul.mubr.f32.gmra.mrb[0].mxu0 %v206
      %v452 = vpop.f32.mrb[0].mxu0
      %v453 = vadd.f32 0.0, %v452
      %v454 = vpop.f32.mrb[0].mxu0
      %455 = vmatprep.mubr.f32.mxu0 %v209
      %456 = vmatmul.mubr.f32.gmra.mrb[0].mxu0 %v208
      %v457 = vpop.f32.mrb[0].mxu0
      %v458 = vadd.f32 0.0, %v457
      %v459 = vpop.f32.mrb[0].mxu0
      %460 = vmatprep.mubr.f32.mxu0 %v211
      %461 = vmatmul.mubr.f32.gmra.mrb[0].mxu0 %v210
      %v462 = vpop.f32.mrb[0].mxu0
      %v463 = vadd.f32 0.0, %v462
      %v464 = vpop.f32.mrb[0].mxu0
      %465 = vmatprep.mubr.f32.mxu0 %v213
      %466 = vmatmul.mubr.f32.gmra.mrb[0].mxu0 %v212
      %v467 = vpop.f32.mrb[0].mxu0
      %v468 = vadd.f32 0.0, %v467
      %v469 = vpop.f32.mrb[0].mxu0
      %470 = vdwg.mxu0
      %vm471 = vcmask 130048
      %472 = vst.msk [vmem:[%s148] sm:$0xff] %vm471, %v313
      %473 = vst.msk [vmem:[%s148 + $0x8] sm:$0xff] %vm471, %v318
      %474 = vst.msk [vmem:[%s148 + $0x10] sm:$0xff] %vm471, %v323
      %475 = vst.msk [vmem:[%s148 + $0x18] sm:$0xff] %vm471, %v328
      %476 = vst.msk [vmem:[%s148 + $0x20] sm:$0xff] %vm471, %v333
      %477 = vst.msk [vmem:[%s148 + $0x28] sm:$0xff] %vm471, %v338
      %478 = vst.msk [vmem:[%s148 + $0x30] sm:$0xff] %vm471, %v343
      %479 = vst.msk [vmem:[%s148 + $0x38] sm:$0xff] %vm471, %v348
      %480 = vst.msk [vmem:[%s148 + $0x40] sm:$0xff] %vm471, %v353
      %481 = vst.msk [vmem:[%s148 + $0x48] sm:$0xff] %vm471, %v358
      %482 = vst.msk [vmem:[%s148 + $0x50] sm:$0xff] %vm471, %v363
      %483 = vst.msk [vmem:[%s148 + $0x58] sm:$0xff] %vm471, %v368
      %484 = vst.msk [vmem:[%s148 + $0x60] sm:$0xff] %vm471, %v373
      %485 = vst.msk [vmem:[%s148 + $0x68] sm:$0xff] %vm471, %v378
      %486 = vst.msk [vmem:[%s148 + $0x70] sm:$0xff] %vm471, %v383
      %487 = vst.msk [vmem:[%s148 + $0x78] sm:$0xff] %vm471, %v388
      %488 = vst.msk [vmem:[%s148 + $0x80] sm:$0xff] %vm471, %v393
      %489 = vst.msk [vmem:[%s148 + $0x88] sm:$0xff] %vm471, %v398
      %490 = vst.msk [vmem:[%s148 + $0x90] sm:$0xff] %vm471, %v403
      %491 = vst.msk [vmem:[%s148 + $0x98] sm:$0xff] %vm471, %v408
      %492 = vst.msk [vmem:[%s148 + $0xa0] sm:$0xff] %vm471, %v413
      %493 = vst.msk [vmem:[%s148 + $0xa8] sm:$0xff] %vm471, %v418
      %494 = vst.msk [vmem:[%s148 + $0xb0] sm:$0xff] %vm471, %v423
      %495 = vst.msk [vmem:[%s148 + $0xb8] sm:$0xff] %vm471, %v428
      %496 = vst.msk [vmem:[%s148 + $0xc0] sm:$0xff] %vm471, %v433
      %497 = vst.msk [vmem:[%s148 + $0xc8] sm:$0xff] %vm471, %v438
      %498 = vst.msk [vmem:[%s148 + $0xd0] sm:$0xff] %vm471, %v443
      %499 = vst.msk [vmem:[%s148 + $0xd8] sm:$0xff] %vm471, %v448
      %500 = vst.msk [vmem:[%s148 + $0xe0] sm:$0xff] %vm471, %v453
      %501 = vst.msk [vmem:[%s148 + $0xe8] sm:$0xff] %vm471, %v458
      %502 = vst.msk [vmem:[%s148 + $0xf0] sm:$0xff] %vm471, %v463
      %503 = vst.msk [vmem:[%s148 + $0xf8] sm:$0xff] %vm471, %v468
      %s504 = smul.u32 32, %s13
      %p505 = scmp.lt.s32.totalorder %s504, 63
      %s506 = scalar_select %p505, %s504, 63
      %s507 = smul.addr %s506, 8
      %s508 = scalar_lea.vmem %s2, %s507
      // Predicated region
      $region29: #{attention_block_forward.2} parent=27 // pred_check
        %p509 = pneg %p78
      $region30: #{attention_block_forward.2} parent=27 // pred_check_branch
        %511 = sbr.rel (%p509) target = $region32
      $region31: #{attention_block_forward.2} parent=27 // pred_region
        %s512 = smul.u32 32, %s13
      $region32: #{attention_block_forward.2} parent=27 // pred_fallthru
        _
    $region28: #{attention_block_forward.2} parent=5 // pred_fallthru
      _
    %p513 = scmp.le.s32.totalorder 2, %s8
    // Predicated region
    $region33: #{attention_block_forward.2} parent=5 // pred_check
      %p514 = pneg %p513
    $region34: #{attention_block_forward.2} parent=5 // pred_check_branch
      %516 = sbr.rel (%p514) target = $region36
    $region35: #{attention_block_forward.2} parent=5 // pred_region
      %s517 = ssub.s32 %s8, 2
      // Predicated region
      $region37: #{attention_block_forward.2} parent=35 // pred_check
        %p518 = pneg %p84
      $region38: #{attention_block_forward.2} parent=35 // pred_check_branch
        %520 = sbr.rel (%p518) target = $region40
      $region39: #{attention_block_forward.2} parent=35 // pred_region
        %s521 = smul.u32 32, %s14
        %p522 = scmp.lt.s32.totalorder %s521, 63
        %s523 = scalar_select %p522, %s521, 63
        %s524 = smul.addr %s523, 8
        %s525 = scalar_lea.vmem %s2, %s524
      $region40: #{attention_block_forward.2} parent=35 // pred_fallthru
        _
    $region36: #{attention_block_forward.2} parent=5 // pred_fallthru
      _
  $region6: #{attention_block_forward.2} parent=0 // loop_footer
    %s12 = sadd.s32 1, %s8
  $region7: #{attention_block_forward.2} parent=0 // loop_footer_branch
    %7 = sbr.rel target = $region3
  $region8: #{attention_block_forward.2} parent=0 // loop_exit
    _

// kernel: attention_block_forward.3
$region0: #{attention_block_forward.3}
  #allocation0 [shape = 'u32[]', space=smem, size = 0x4, offset = 0x4, fixed_abs, tag = 'smem constant byte address 0x4 - core index']
  #allocation1 [shape = 'u32[144,128]{1,0:T(1,128)}', space=vmem, size = 0x12000, scoped, tag = 'internal scratch']
  #allocation2 [shape = 'f32[128,32]{1,0:T(8,128)}', space=vmem, size = 0x10000, scoped, tag = 'scratch operand']
  #allocation3 [shape = 'f32[128,32]{1,0:T(8,128)}', space=vmem, size = 0x10000, scoped, tag = 'scratch operand']
  %s0 = inlined_call_operand.vmem [shape: f32[2,128,32], index: 0, kind: input, shape index: {}]
  %s1 = inlined_call_operand.vmem [shape: f32[2,128,32], index: 1, kind: input, shape index: {}]
  %s2 = inlined_call_operand.vmem [shape: f32[32,32], index: 2, kind: input, shape index: {}]
  %s3 = inlined_call_operand.vmem [shape: f32[1,32], index: 3, kind: input, shape index: {}]
  %s4 = inlined_call_operand.vmem [shape: f32[32,32], index: 4, kind: input, shape index: {}]
  %s5 = inlined_call_operand.vmem [shape: f32[1,32], index: 5, kind: input, shape index: {}]
  %s6 = inlined_call_operand.vmem [shape: f32[32,32], index: 6, kind: input, shape index: {}]
  %s7 = inlined_call_operand.vmem [shape: f32[1,32], index: 7, kind: input, shape index: {}]
  %s8 = inlined_call_operand.vmem [shape: f32[1,32], index: 8, kind: input, shape index: {}]
  %s9 = inlined_call_operand.hbm [shape: f32[2,128,32], index: 9, kind: output, shape index: {0}]
  %s10 = inlined_call_operand.hbm [shape: f32[2,128,128], index: 10, kind: output, shape index: {1}]
  %11 = xla_tuple %s9, %s10
  %s12 = sld [smem:[#allocation0]]
  $region81: #{attention_block_forward.3} parent=0
    _
  %s14 = ssub.s32 1, %s12
  %s15 = scalar_select 0, %s14, %s12
  $region1: #{attention_block_forward.3} parent=0
    #allocation4 [shape = 'u8[131072]{0}', space=vmem, size = 0x20000, scoped, tag = 'output window, operand 0']
    #allocation5 [shape = 's32[2]{0}', space=sflag, size = 0x8, scoped, tag = 'scoped memory for attention_block_forward.3']
    #allocation6 [shape = 'u8[131072]{0}', space=vmem, size = 0x20000, scoped, tag = 'output window, operand 1']
    #allocation7 [shape = 's32[2]{0}', space=sflag, size = 0x8, scoped, tag = 'scoped memory for attention_block_forward.3']
    %16 = vsyncpa [#allocation5], 0
    %s17 = scalar_lea.sflag [#allocation5], 1
    %18 = vsyncpa %s17, 0
    %19 = vsyncpa [#allocation7], 0
    %s20 = scalar_lea.sflag [#allocation7], 1
    %21 = vsyncpa %s20, 0
    loop: start=0, step=1, limit=4
    $region2: #{attention_block_forward.3} parent=1 // loop_pre_header
      _
    $region3: #{attention_block_forward.3} parent=1 // loop_header
      %s23 = sphi 0, %s27
      %p24 = scmp.ge.s32.totalorder %s23, 4
      %s30 = sphi 0, %s42
      %s31 = sphi 0, %s38
      %s32 = sphi 0, %s30
      %s33 = sphi 0, %s31
      %s34 = sphi 0, %s32
      %s35 = sphi 0, %s33
      %s45 = sphi 0, %s47
      %s48 = sphi 0, %s45
      %s49 = sphi 0, %s48
      %s65 = sphi 0, %s49
      %s71 = sphi 0, %s73
      %s74 = sphi 0, %s71
      %s75 = sphi 0, %s74
      %s91 = sphi 0, %s75
      %s95 = sphi 0, %s95
      %s97 = sphi 0, %s95
      %s98 = sphi 0, %s97
      %s112 = sphi 0, %s98
      %s116 = sphi 0, %s116
      %s118 = sphi 0, %s116
      %s119 = sphi 0, %s118
      %s133 = sphi 0, %s119
      %s137 = sphi 0, %s137
      %s139 = sphi 0, %s137
      %s140 = sphi 0, %s139
      %s154 = sphi 0, %s140
      %s158 = sphi 0, %s158
      %s160 = sphi 0, %s158
      %s161 = sphi 0, %s160
      %s175 = sphi 0, %s161
      %s179 = sphi 0, %s179
      %s181 = sphi 0, %s179
      %s182 = sphi 0, %s181
      %s196 = sphi 0, %s182
      %s200 = sphi 0, %s200
      %s202 = sphi 0, %s200
      %s203 = sphi 0, %s202
      %s217 = sphi 0, %s203
      %s221 = sphi 0, %s221
      %s223 = sphi 0, %s221
      %s224 = sphi 0, %s223
      %s238 = sphi 0, %s224
      %s246 = sphi 0, %s248
      %s249 = sphi 0, %s246
      %s250 = sphi 0, %s249
      %s266 = sphi 0, %s250
      %s274 = sphi 0, %s276
      %s277 = sphi 0, %s274
      %s278 = sphi 0, %s277
      %s294 = sphi 0, %s278
    $region4: #{attention_block_forward.3} parent=1 // loop_header_branch
      %26 = sbr.rel (%p24) target = $region8
    $region5: #{attention_block_forward.3} parent=1 // loop_body
      %s28 = ssub.s32 %s23, 1
      %s29 = ssub.s32 %s23, 2
      %s36 = sadd.s32 1, %s31
      %p37 = scmp.ge.s32.totalorder %s36, 1
      %s38 = scalar_select %p37, 0, %s36
      %s39 = sadd.s32 1, %s30
      %s40 = scalar_select %p37, %s39, %s30
      %p41 = scmp.ge.s32.totalorder %s40, 2
      %s42 = scalar_select %p41, 0, %s40
      %s43 = ssub.s32 %s30, %s42
      %p44 = scmp.eq.s32.totalorder %s43, 0
      %s46 = sadd.s32 %s45, 1
      %s47 = scalar_select %p44, %s45, %s46
      %p50 = pneg %p44
      %p51 = scmp.eq.s32.totalorder %s23, 1
      %p52 = por %p50, %p51
      %p53 = scmp.ne.s32.totalorder %s45, %s48
      %p54 = scmp.eq.s32.totalorder %s23, 0
      %p55 = por %p53, %p54
      %p56 = scmp.ne.s32.totalorder %s45, %s48
      %p57 = scmp.eq.s32.totalorder %s28, 1
      %p58 = por %p56, %p57
      %p59 = scmp.ne.s32.totalorder %s48, %s49
      %p60 = scmp.eq.s32.totalorder %s28, 0
      %p61 = por %p59, %p60
      %p62 = scmp.ne.s32.totalorder %s48, %s49
      %p63 = scmp.eq.s32.totalorder %s29, 1
      %p64 = por %p62, %p63
      %p66 = scmp.ne.s32.totalorder %s49, %s65
      %p67 = scmp.eq.s32.totalorder %s29, 0
      %p68 = por %p66, %p67
      %s69 = ssub.s32 %s30, %s42
      %p70 = scmp.eq.s32.totalorder %s69, 0
      %s72 = sadd.s32 %s71, 1
      %s73 = scalar_select %p70, %s71, %s72
      %p76 = pneg %p70
      %p77 = scmp.eq.s32.totalorder %s23, 1
      %p78 = por %p76, %p77
      %p79 = scmp.ne.s32.totalorder %s71, %s74
      %p80 = scmp.eq.s32.totalorder %s23, 0
      %p81 = por %p79, %p80
      %p82 = scmp.ne.s32.totalorder %s71, %s74
      %p83 = scmp.eq.s32.totalorder %s28, 1
      %p84 = por %p82, %p83
      %p85 = scmp.ne.s32.totalorder %s74, %s75
      %p86 = scmp.eq.s32.totalorder %s28, 0
      %p87 = por %p85, %p86
      %p88 = scmp.ne.s32.totalorder %s74, %s75
      %p89 = scmp.eq.s32.totalorder %s29, 1
      %p90 = por %p88, %p89
      %p92 = scmp.ne.s32.totalorder %s75, %s91
      %p93 = scmp.eq.s32.totalorder %s29, 0
      %p94 = por %p92, %p93
      %s96 = sadd.s32 %s95, 1
      %p99 = scmp.eq.s32.totalorder %s23, 1
      %p100 = scmp.ne.s32.totalorder %s95, %s97
      %p101 = scmp.eq.s32.totalorder %s23, 0
      %p102 = por %p100, %p101
      %p103 = scmp.ne.s32.totalorder %s95, %s97
      %p104 = scmp.eq.s32.totalorder %s28, 1
      %p105 = por %p103, %p104
      %p106 = scmp.ne.s32.totalorder %s97, %s98
      %p107 = scmp.eq.s32.totalorder %s28, 0
      %p108 = por %p106, %p107
      %p109 = scmp.ne.s32.totalorder %s97, %s98
      %p110 = scmp.eq.s32.totalorder %s29, 1
      %p111 = por %p109, %p110
      %p113 = scmp.ne.s32.totalorder %s98, %s112
      %p114 = scmp.eq.s32.totalorder %s29, 0
      %p115 = por %p113, %p114
      %s117 = sadd.s32 %s116, 1
      %p120 = scmp.eq.s32.totalorder %s23, 1
      %p121 = scmp.ne.s32.totalorder %s116, %s118
      %p122 = scmp.eq.s32.totalorder %s23, 0
      %p123 = por %p121, %p122
      %p124 = scmp.ne.s32.totalorder %s116, %s118
      %p125 = scmp.eq.s32.totalorder %s28, 1
      %p126 = por %p124, %p125
      %p127 = scmp.ne.s32.totalorder %s118, %s119
      %p128 = scmp.eq.s32.totalorder %s28, 0
      %p129 = por %p127, %p128
      %p130 = scmp.ne.s32.totalorder %s118, %s119
      %p131 = scmp.eq.s32.totalorder %s29, 1
      %p132 = por %p130, %p131
      %p134 = scmp.ne.s32.totalorder %s119, %s133
      %p135 = scmp.eq.s32.totalorder %s29, 0
      %p136 = por %p134, %p135
      %s138 = sadd.s32 %s137, 1
      %p141 = scmp.eq.s32.totalorder %s23, 1
      %p142 = scmp.ne.s32.totalorder %s137, %s139
      %p143 = scmp.eq.s32.totalorder %s23, 0
      %p144 = por %p142, %p143
      %p145 = scmp.ne.s32.totalorder %s137, %s139
      %p146 = scmp.eq.s32.totalorder %s28, 1
      %p147 = por %p145, %p146
      %p148 = scmp.ne.s32.totalorder %s139, %s140
      %p149 = scmp.eq.s32.totalorder %s28, 0
      %p150 = por %p148, %p149
      %p151 = scmp.ne.s32.totalorder %s139, %s140
      %p152 = scmp.eq.s32.totalorder %s29, 1
      %p153 = por %p151, %p152
      %p155 = scmp.ne.s32.totalorder %s140, %s154
      %p156 = scmp.eq.s32.totalorder %s29, 0
      %p157 = por %p155, %p156
      %s159 = sadd.s32 %s158, 1
      %p162 = scmp.eq.s32.totalorder %s23, 1
      %p163 = scmp.ne.s32.totalorder %s158, %s160
      %p164 = scmp.eq.s32.totalorder %s23, 0
      %p165 = por %p163, %p164
      %p166 = scmp.ne.s32.totalorder %s158, %s160
      %p167 = scmp.eq.s32.totalorder %s28, 1
      %p168 = por %p166, %p167
      %p169 = scmp.ne.s32.totalorder %s160, %s161
      %p170 = scmp.eq.s32.totalorder %s28, 0
      %p171 = por %p169, %p170
      %p172 = scmp.ne.s32.totalorder %s160, %s161
      %p173 = scmp.eq.s32.totalorder %s29, 1
      %p174 = por %p172, %p173
      %p176 = scmp.ne.s32.totalorder %s161, %s175
      %p177 = scmp.eq.s32.totalorder %s29, 0
      %p178 = por %p176, %p177
      %s180 = sadd.s32 %s179, 1
      %p183 = scmp.eq.s32.totalorder %s23, 1
      %p184 = scmp.ne.s32.totalorder %s179, %s181
      %p185 = scmp.eq.s32.totalorder %s23, 0
      %p186 = por %p184, %p185
      %p187 = scmp.ne.s32.totalorder %s179, %s181
      %p188 = scmp.eq.s32.totalorder %s28, 1
      %p189 = por %p187, %p188
      %p190 = scmp.ne.s32.totalorder %s181, %s182
      %p191 = scmp.eq.s32.totalorder %s28, 0
      %p192 = por %p190, %p191
      %p193 = scmp.ne.s32.totalorder %s181, %s182
      %p194 = scmp.eq.s32.totalorder %s29, 1
      %p195 = por %p193, %p194
      %p197 = scmp.ne.s32.totalorder %s182, %s196
      %p198 = scmp.eq.s32.totalorder %s29, 0
      %p199 = por %p197, %p198
      %s201 = sadd.s32 %s200, 1
      %p204 = scmp.eq.s32.totalorder %s23, 1
      %p205 = scmp.ne.s32.totalorder %s200, %s202
      %p206 = scmp.eq.s32.totalorder %s23, 0
      %p207 = por %p205, %p206
      %p208 = scmp.ne.s32.totalorder %s200, %s202
      %p209 = scmp.eq.s32.totalorder %s28, 1
      %p210 = por %p208, %p209
      %p211 = scmp.ne.s32.totalorder %s202, %s203
      %p212 = scmp.eq.s32.totalorder %s28, 0
      %p213 = por %p211, %p212
      %p214 = scmp.ne.s32.totalorder %s202, %s203
      %p215 = scmp.eq.s32.totalorder %s29, 1
      %p216 = por %p214, %p215
      %p218 = scmp.ne.s32.totalorder %s203, %s217
      %p219 = scmp.eq.s32.totalorder %s29, 0
      %p220 = por %p218, %p219
      %s222 = sadd.s32 %s221, 1
      %p225 = scmp.eq.s32.totalorder %s23, 1
      %p226 = scmp.ne.s32.totalorder %s221, %s223
      %p227 = scmp.eq.s32.totalorder %s23, 0
      %p228 = por %p226, %p227
      %p229 = scmp.ne.s32.totalorder %s221, %s223
      %p230 = scmp.eq.s32.totalorder %s28, 1
      %p231 = por %p229, %p230
      %p232 = scmp.ne.s32.totalorder %s223, %s224
      %p233 = scmp.eq.s32.totalorder %s28, 0
      %p234 = por %p232, %p233
      %p235 = scmp.ne.s32.totalorder %s223, %s224
      %p236 = scmp.eq.s32.totalorder %s29, 1
      %p237 = por %p235, %p236
      %p239 = scmp.ne.s32.totalorder %s224, %s238
      %p240 = scmp.eq.s32.totalorder %s29, 0
      %p241 = por %p239, %p240
      %s242 = ssub.s32 %s30, %s42
      %s243 = ssub.s32 %s31, %s38
      %s244 = sor.u32 %s242, %s243
      %p245 = scmp.eq.s32.totalorder %s244, 0
      %s247 = sadd.s32 %s246, 1
      %s248 = scalar_select %p245, %s246, %s247
      %p251 = pneg %p245
      %p252 = scmp.eq.s32.totalorder %s23, 1
      %p253 = por %p251, %p252
      %p254 = scmp.ne.s32.totalorder %s246, %s249
      %p255 = scmp.eq.s32.totalorder %s23, 0
      %p256 = por %p254, %p255
      %p257 = scmp.ne.s32.totalorder %s246, %s249
      %p258 = scmp.eq.s32.totalorder %s28, 1
      %p259 = por %p257, %p258
      %p260 = scmp.ne.s32.totalorder %s249, %s250
      %p261 = scmp.eq.s32.totalorder %s28, 0
      %p262 = por %p260, %p261
      %p263 = scmp.ne.s32.totalorder %s249, %s250
      %p264 = scmp.eq.s32.totalorder %s29, 1
      %p265 = por %p263, %p264
      %p267 = scmp.ne.s32.totalorder %s250, %s266
      %p268 = scmp.eq.s32.totalorder %s29, 0
      %p269 = por %p267, %p268
      %s270 = ssub.s32 %s30, %s42
      %s271 = ssub.s32 %s31, %s38
      %s272 = sor.u32 %s270, %s271
      %p273 = scmp.eq.s32.totalorder %s272, 0
      %s275 = sadd.s32 %s274, 1
      %s276 = scalar_select %p273, %s274, %s275
      %p279 = pneg %p273
      %p280 = scmp.eq.s32.totalorder %s23, 1
      %p281 = por %p279, %p280
      %p282 = scmp.ne.s32.totalorder %s274, %s277
      %p283 = scmp.eq.s32.totalorder %s23, 0
      %p284 = por %p282, %p283
      %p285 = scmp.ne.s32.totalorder %s274, %s277
      %p286 = scmp.eq.s32.totalorder %s28, 1
      %p287 = por %p285, %p286
      %p288 = scmp.ne.s32.totalorder %s277, %s278
      %p289 = scmp.eq.s32.totalorder %s28, 0
      %p290 = por %p288, %p289
      %p291 = scmp.ne.s32.totalorder %s277, %s278
      %p292 = scmp.eq.s32.totalorder %s29, 1
      %p293 = por %p291, %p292
      %p295 = scmp.ne.s32.totalorder %s278, %s294
      %p296 = scmp.eq.s32.totalorder %s29, 0
      %p297 = por %p295, %p296
      %p298 = scmp.le.s32.totalorder 1, %s23
      %p299 = scmp.lt.s32.totalorder %s23, 3
      %p300 = pnand %p298, %p299
      %p301 = pneg %p300
      // Predicated region
      $region9: #{attention_block_forward.3} parent=5 // pred_check
        _
      $region10: #{attention_block_forward.3} parent=5 // pred_check_branch
        %303 = sbr.rel (%p300) target = $region12
      $region11: #{attention_block_forward.3} parent=5 // pred_region
        %s304 = ssub.s32 %s23, 1
        // Predicated region
        $region13: #{attention_block_forward.3} parent=11 // pred_check
          %p305 = pneg %p108
        $region14: #{attention_block_forward.3} parent=11 // pred_check_branch
          %307 = sbr.rel (%p305) target = $region16
        $region15: #{attention_block_forward.3} parent=11 // pred_region
          _
        $region16: #{attention_block_forward.3} parent=11 // pred_fallthru
          _
        // Predicated region
        $region17: #{attention_block_forward.3} parent=11 // pred_check
          %p308 = pneg %p129
        $region18: #{attention_block_forward.3} parent=11 // pred_check_branch
          %310 = sbr.rel (%p308) target = $region20
        $region19: #{attention_block_forward.3} parent=11 // pred_region
          _
        $region20: #{attention_block_forward.3} parent=11 // pred_fallthru
          _
        // Predicated region
        $region21: #{attention_block_forward.3} parent=11 // pred_check
          %p311 = pneg %p150
        $region22: #{attention_block_forward.3} parent=11 // pred_check_branch
          %313 = sbr.rel (%p311) target = $region24
        $region23: #{attention_block_forward.3} parent=11 // pred_region
          _
        $region24: #{attention_block_forward.3} parent=11 // pred_fallthru
          _
        // Predicated region
        $region25: #{attention_block_forward.3} parent=11 // pred_check
          %p314 = pneg %p171
        $region26: #{attention_block_forward.3} parent=11 // pred_check_branch
          %316 = sbr.rel (%p314) target = $region28
        $region27: #{attention_block_forward.3} parent=11 // pred_region
          _
        $region28: #{attention_block_forward.3} parent=11 // pred_fallthru
          _
        // Predicated region
        $region29: #{attention_block_forward.3} parent=11 // pred_check
          %p317 = pneg %p192
        $region30: #{attention_block_forward.3} parent=11 // pred_check_branch
          %319 = sbr.rel (%p317) target = $region32
        $region31: #{attention_block_forward.3} parent=11 // pred_region
          _
        $region32: #{attention_block_forward.3} parent=11 // pred_fallthru
          _
        // Predicated region
        $region33: #{attention_block_forward.3} parent=11 // pred_check
          %p320 = pneg %p213
        $region34: #{attention_block_forward.3} parent=11 // pred_check_branch
          %322 = sbr.rel (%p320) target = $region36
        $region35: #{attention_block_forward.3} parent=11 // pred_region
          _
        $region36: #{attention_block_forward.3} parent=11 // pred_fallthru
          _
        // Predicated region
        $region37: #{attention_block_forward.3} parent=11 // pred_check
          %p323 = pneg %p234
        $region38: #{attention_block_forward.3} parent=11 // pred_check_branch
          %325 = sbr.rel (%p323) target = $region40
        $region39: #{attention_block_forward.3} parent=11 // pred_region
          _
        $region40: #{attention_block_forward.3} parent=11 // pred_fallthru
          _
      $region12: #{attention_block_forward.3} parent=5 // pred_fallthru
        _
      %p326 = scmp.lt.s32.totalorder %s23, 2
      // Predicated region
      $region41: #{attention_block_forward.3} parent=5 // pred_check
        %p327 = pneg %p326
      $region42: #{attention_block_forward.3} parent=5 // pred_check_branch
        %329 = sbr.rel (%p327) target = $region44
      $region43: #{attention_block_forward.3} parent=5 // pred_region
        // Predicated region
        $region45: #{attention_block_forward.3} parent=43 // pred_check
          %p330 = pneg %p55
        $region46: #{attention_block_forward.3} parent=43 // pred_check_branch
          %332 = sbr.rel (%p330) target = $region48
        $region47: #{attention_block_forward.3} parent=43 // pred_region
          %p333 = scmp.lt.s32.totalorder %s30, 1
          %s334 = scalar_select %p333, %s30, 1
          %s335 = smul.addr %s334, 16
          %s336 = smul.addr %s335, 8
          %s337 = scalar_lea.vmem %s0, %s336
        $region48: #{attention_block_forward.3} parent=43 // pred_fallthru
          _
        // Predicated region
        $region49: #{attention_block_forward.3} parent=43 // pred_check
          %p338 = pneg %p81
        $region50: #{attention_block_forward.3} parent=43 // pred_check_branch
          %340 = sbr.rel (%p338) target = $region52
        $region51: #{attention_block_forward.3} parent=43 // pred_region
          %p341 = scmp.lt.s32.totalorder %s30, 1
          %s342 = scalar_select %p341, %s30, 1
          %s343 = smul.addr %s342, 16
          %s344 = smul.addr %s343, 8
          %s345 = scalar_lea.vmem %s1, %s344
        $region52: #{attention_block_forward.3} parent=43 // pred_fallthru
          _
      $region44: #{attention_block_forward.3} parent=5 // pred_fallthru
        _
      %p346 = scmp.le.s32.totalorder 1, %s23
      %p347 = scmp.lt.s32.totalorder %s23, 3
      %p348 = pnand %p346, %p347
      %p349 = pneg %p348
      // Predicated region
      $region53: #{attention_block_forward.3} parent=5 // pred_check
        _
      $region54: #{attention_block_forward.3} parent=5 // pred_check_branch
        %351 = sbr.rel (%p348) target = $region56
      $region55: #{attention_block_forward.3} parent=5 // pred_region
        %s352 = ssub.s32 %s23, 1
        %p353 = scmp.lt.s32.totalorder %s32, 1
        %s354 = scalar_select %p353, %s32, 1
        %s355 = smul.addr %s354, 16
        %s356 = smul.addr %s355, 8
        %s357 = scalar_lea.vmem %s0, %s356
        %p358 = pneg %p61
        %p359 = pneg %p58
        %p360 = scmp.lt.s32.totalorder %s32, 1
        %s361 = scalar_select %p360, %s32, 1
        %s362 = smul.addr %s361, 16
        %s363 = smul.addr %s362, 8
        %s364 = scalar_lea.vmem %s1, %s363
        %p365 = pneg %p87
        %p366 = pneg %p84
        %p367 = pneg %p108
        %p368 = pneg %p105
        %p369 = pneg %p129
        %p370 = pneg %p126
        %p371 = pneg %p150
        %p372 = pneg %p147
        %p373 = pneg %p171
        %p374 = pneg %p168
        %p375 = pneg %p192
        %p376 = pneg %p189
        %p377 = pneg %p213
        %p378 = pneg %p210
        %p379 = pneg %p234
        %p380 = pneg %p231
        %p381 = pneg %p262
        %p382 = pneg %p259
        %s383 = sand.u32 %s249, 1
        %s384 = scalar_lea.sflag [#allocation5], %s383
        %s385 = sand.u32 %s249, 1
        %s386 = smul.addr %s385, 128
        %s387 = scalar_lea.vmem [#allocation4], %s386
        %p388 = pneg %p290
        %p389 = pneg %p287
        %s390 = sand.u32 %s277, 1
        %s391 = scalar_lea.sflag [#allocation7], %s390
        %s392 = sand.u32 %s277, 1
        %s393 = smul.addr %s392, 128
        %s394 = scalar_lea.vmem [#allocation6], %s393
        %p395 = scmp.lt.s32.totalorder %s32, 1
        %s396 = scalar_select %p395, %s32, 1
        %s397 = smul.addr %s396, 16
        %s398 = smul.addr %s397, 8
        %s399 = scalar_lea.vmem %s0, %s398
        %p400 = scmp.lt.s32.totalorder %s32, 1
        %s401 = scalar_select %p400, %s32, 1
        %s402 = smul.addr %s401, 16
        %s403 = smul.addr %s402, 8
        %s404 = scalar_lea.vmem %s1, %s403
        %s405 = smul.u32 16, %s33
        %s406 = smul.u32 16, %s33
        %p407 = scmp.eq.s32.totalorder %s33, 0
        // Predicated region
        $region57: #{attention_block_forward.3} parent=55 // pred_check
          %p408 = pneg %p407
        $region58: #{attention_block_forward.3} parent=55 // pred_check_branch
          %410 = sbr.rel (%p408) target = $region60
        $region59: #{attention_block_forward.3} parent=55 // pred_region
          %v411 = vld [vmem:[%s399] sm:$0xff]
          %v412 = vld [vmem:[%s399 + $0x8] sm:$0xff]
          %v413 = vld [vmem:[%s399 + $0x10] sm:$0xff]
          %v414 = vld [vmem:[%s399 + $0x18] sm:$0xff]
          %v415 = vld [vmem:[%s399 + $0x20] sm:$0xff]
          %v416 = vld [vmem:[%s399 + $0x28] sm:$0xff]
          %v417 = vld [vmem:[%s399 + $0x30] sm:$0xff]
          %v418 = vld [vmem:[%s399 + $0x38] sm:$0xff]
          %v419 = vld [vmem:[%s399 + $0x40] sm:$0xff]
          %v420 = vld [vmem:[%s399 + $0x48] sm:$0xff]
          %v421 = vld [vmem:[%s399 + $0x50] sm:$0xff]
          %v422 = vld [vmem:[%s399 + $0x58] sm:$0xff]
          %v423 = vld [vmem:[%s399 + $0x60] sm:$0xff]
          %v424 = vld [vmem:[%s399 + $0x68] sm:$0xff]
          %v425 = vld [vmem:[%s399 + $0x70] sm:$0xff]
          %v426 = vld [vmem:[%s399 + $0x78] sm:$0xff]
          %v427 = vld [vmem:[%s4] sm:$0xff]
          %v428 = vld [vmem:[%s4 + $0x8] sm:$0xff]
          %v429 = vld [vmem:[%s4 + $0x10] sm:$0xff]
          %v430 = vld [vmem:[%s4 + $0x18] sm:$0xff]
          %v431 = vld [vmem:[%s5] sm:$0x1]
          %v433 = vlaneseq
          %v434 = vshrl.u32 %v433, 7
          %v435 = vsub.s32 0, %v434
          %v436 = vrot.slane %v431, %v435
          %vm438 = vcmask 261120
          %v440 = vsel %vm438, %v411, 0
          %v443 = vsel %vm438, %v412, 0
          %v446 = vsel %vm438, %v413, 0
          %v449 = vsel %vm438, %v414, 0
          %v452 = vsel %vm438, %v415, 0
          %v455 = vsel %vm438, %v416, 0
          %v458 = vsel %vm438, %v417, 0
          %v461 = vsel %vm438, %v418, 0
          %v464 = vsel %vm438, %v419, 0
          %v467 = vsel %vm438, %v420, 0
          %v470 = vsel %vm438, %v421, 0
          %v473 = vsel %vm438, %v422, 0
          %v476 = vsel %vm438, %v423, 0
          %v479 = vsel %vm438, %v424, 0
          %v482 = vsel %vm438, %v425, 0
          %v485 = vsel %vm438, %v426, 0
          %487 = vmatprep.subr.mxu0 0.0
          %488 = vmatpush1.msra.mxu0 %v427
          %489 = vmatprep.subr.mxu0 0.0
          %490 = vmatpush1.msra.mxu0 %v428
          %491 = vmatprep.subr.mxu0 0.0
          %492 = vmatpush1.msra.mxu0 %v429
          %493 = vmatprep.subr.mxu0 0.0
          %494 = vmatpush1.msra.mxu0 %v430
          %495 = vmatprep.subr.mxu0 0.0
          %496 = vmatpush1.msra.mxu0 0.0
          %497 = vmatprep.subr.mxu0 0.0
          %498 = vmatpush1.msra.mxu0 0.0
          %499 = vmatprep.subr.mxu0 0.0
          %500 = vmatpush1.msra.mxu0 0.0
          %501 = vmatprep.subr.mxu0 0.0
          %502 = vmatpush1.msra.mxu0 0.0
          %503 = vmatprep.subr.mxu0 0.0
          %504 = vmatpush1.msra.mxu0 0.0
          %505 = vmatprep.subr.mxu0 0.0
          %506 = vmatpush1.msra.mxu0 0.0
          %507 = vmatprep.subr.mxu0 0.0
          %508 = vmatpush1.msra.mxu0 0.0
          %509 = vmatprep.subr.mxu0 0.0
          %510 = vmatpush1.msra.mxu0 0.0
          %511 = vmatprep.subr.mxu0 0.0
          %512 = vmatpush1.msra.mxu0 0.0
          %513 = vmatprep.subr.mxu0 0.0
          %514 = vmatpush1.msra.mxu0 0.0
          %515 = vmatprep.subr.mxu0 0.0
          %516 = vmatpush1.msra.mxu0 0.0
          %517 = vmatprep.subr.mxu0 0.0
          %518 = vmatpush1.msra.mxu0 0.0
          %519 = vmatprep.subr.mxu0 0.0
          %520 = vmatpush1.msra.mxu0 0.0
          %521 = vmatprep.subr.mxu0 0.0
          %522 = vmatpush1.msra.mxu0 0.0
          %523 = vmatprep.subr.mxu0 0.0
          %524 = vmatpush1.msra.mxu0 0.0
          %525 = vmatprep.subr.mxu0 0.0
          %526 = vmatpush1.msra.mxu0 0.0
          %527 = vmatprep.subr.mxu0 0.0
          %528 = vmatpush1.msra.mxu0 0.0
          %529 = vmatprep.subr.mxu0 0.0
          %530 = vmatpush1.msra.mxu0 0.0
          %531 = vmatprep.subr.mxu0 0.0
          %532 = vmatpush1.msra.mxu0 0.0
          %533 = vmatprep.subr.mxu0 0.0
          %534 = vmatpush1.msra.mxu0 0.0
          %535 = vmatprep.subr.mxu0 0.0
          %536 = vmatpush1.msra.mxu0 0.0
          %537 = vmatprep.subr.mxu0 0.0
          %538 = vmatpush1.msra.mxu0 0.0
          %539 = vmatprep.subr.mxu0 0.0
          %540 = vmatpush1.msra.mxu0 0.0
          %541 = vmatprep.subr.mxu0 0.0
          %542 = vmatpush1.msra.mxu0 0.0
          %543 = vmatprep.subr.mxu0 0.0
          %544 = vmatpush1.msra.mxu0 0.0
          %545 = vmatprep.subr.mxu0 0.0
          %546 = vmatpush1.msra.mxu0 0.0
          %547 = vmatprep.subr.mxu0 0.0
          %548 = vmatpush1.msra.mxu0 0.0
          %549 = vmatprep.subr.mxu0 0.0
          %550 = vmatpush1.msra.mxu0 0.0
          %551 = vmatprep.mubr.f32.mxu0 0.0
          %552 = vmatmul.mubr.f32.gmra.mrb[0].mxu0 %v440
          %v553 = vpop.f32.mrb[0].mxu0
          %v554 = vadd.f32 %v436, %v553
          %v555 = vpop.f32.mrb[0].mxu0
          %556 = vmatprep.mubr.f32.mxu0 0.0
          %557 = vmatmul.mubr.f32.gmra.mrb[0].mxu0 %v443
          %v558 = vpop.f32.mrb[0].mxu0
          %v559 = vadd.f32 %v436, %v558
          %v560 = vpop.f32.mrb[0].mxu0
          %561 = vmatprep.mubr.f32.mxu0 0.0
          %562 = vmatmul.mubr.f32.gmra.mrb[0].mxu0 %v446
          %v563 = vpop.f32.mrb[0].mxu0
          %v564 = vadd.f32 %v436, %v563
          %v565 = vpop.f32.mrb[0].mxu0
          %566 = vmatprep.mubr.f32.mxu0 0.0
          %567 = vmatmul.mubr.f32.gmra.mrb[0].mxu0 %v449
          %v568 = vpop.f32.mrb[0].mxu0
          %v569 = vadd.f32 %v436, %v568
          %v570 = vpop.f32.mrb[0].mxu0
          %571 = vmatprep.mubr.f32.mxu0 0.0
          %572 = vmatmul.mubr.f32.gmra.mrb[0].mxu0 %v452
          %v573 = vpop.f32.mrb[0].mxu0
          %v574 = vadd.f32 %v436, %v573
          %v575 = vpop.f32.mrb[0].mxu0
          %576 = vmatprep.mubr.f32.mxu0 0.0
          %577 = vmatmul.mubr.f32.gmra.mrb[0].mxu0 %v455
          %v578 = vpop.f32.mrb[0].mxu0
          %v579 = vadd.f32 %v436, %v578
          %v580 = vpop.f32.mrb[0].mxu0
          %581 = vmatprep.mubr.f32.mxu0 0.0
          %582 = vmatmul.mubr.f32.gmra.mrb[0].mxu0 %v458
          %v583 = vpop.f32.mrb[0].mxu0
          %v584 = vadd.f32 %v436, %v583
          %v585 = vpop.f32.mrb[0].mxu0
          %586 = vmatprep.mubr.f32.mxu0 0.0
          %587 = vmatmul.mubr.f32.gmra.mrb[0].mxu0 %v461
          %v588 = vpop.f32.mrb[0].mxu0
          %v589 = vadd.f32 %v436, %v588
          %v590 = vpop.f32.mrb[0].mxu0
          %591 = vmatprep.mubr.f32.mxu0 0.0
          %592 = vmatmul.mubr.f32.gmra.mrb[0].mxu0 %v464
          %v593 = vpop.f32.mrb[0].mxu0
          %v594 = vadd.f32 %v436, %v593
          %v595 = vpop.f32.mrb[0].mxu0
          %596 = vmatprep.mubr.f32.mxu0 0.0
          %597 = vmatmul.mubr.f32.gmra.mrb[0].mxu0 %v467
          %v598 = vpop.f32.mrb[0].mxu0
          %v599 = vadd.f32 %v436, %v598
          %v600 = vpop.f32.mrb[0].mxu0
          %601 = vmatprep.mubr.f32.mxu0 0.0
          %602 = vmatmul.mubr.f32.gmra.mrb[0].mxu0 %v470
          %v603 = vpop.f32.mrb[0].mxu0
          %v604 = vadd.f32 %v436, %v603
          %v605 = vpop.f32.mrb[0].mxu0
          %606 = vmatprep.mubr.f32.mxu0 0.0
          %607 = vmatmul.mubr.f32.gmra.mrb[0].mxu0 %v473
          %v608 = vpop.f32.mrb[0].mxu0
          %v609 = vadd.f32 %v436, %v608
          %v610 = vpop.f32.mrb[0].mxu0
          %611 = vmatprep.mubr.f32.mxu0 0.0
          %612 = vmatmul.mubr.f32.gmra.mrb[0].mxu0 %v476
          %v613 = vpop.f32.mrb[0].mxu0
          %v614 = vadd.f32 %v436, %v613
          %v615 = vpop.f32.mrb[0].mxu0
          %616 = vmatprep.mubr.f32.mxu0 0.0
          %617 = vmatmul.mubr.f32.gmra.mrb[0].mxu0 %v479
          %v618 = vpop.f32.mrb[0].mxu0
          %v619 = vadd.f32 %v436, %v618
          %v620 = vpop.f32.mrb[0].mxu0
          %621 = vmatprep.mubr.f32.mxu0 0.0
          %622 = vmatmul.mubr.f32.gmra.mrb[0].mxu0 %v482
          %v623 = vpop.f32.mrb[0].mxu0
          %v624 = vadd.f32 %v436, %v623
          %v625 = vpop.f32.mrb[0].mxu0
          %626 = vmatprep.mubr.f32.mxu0 0.0
          %627 = vmatmul.mubr.f32.gmra.mrb[0].mxu0 %v485
          %v628 = vpop.f32.mrb[0].mxu0
          %v629 = vadd.f32 %v436, %v628
          %v630 = vpop.f32.mrb[0].mxu0
          %631 = vdwg.mxu0
          %632 = vst.msk [vmem:[#allocation2] sm:$0xff] %vm438, %v554
          %633 = vst.msk [vmem:[#allocation2 + $0x8] sm:$0xff] %vm438, %v559
          %634 = vst.msk [vmem:[#allocation2 + $0x10] sm:$0xff] %vm438, %v564
          %635 = vst.msk [vmem:[#allocation2 + $0x18] sm:$0xff] %vm438, %v569
          %636 = vst.msk [vmem:[#allocation2 + $0x20] sm:$0xff] %vm438, %v574
          %637 = vst.msk [vmem:[#allocation2 + $0x28] sm:$0xff] %vm438, %v579
          %638 = vst.msk [vmem:[#allocation2 + $0x30] sm:$0xff] %vm438, %v584
          %639 = vst.msk [vmem:[#allocation2 + $0x38] sm:$0xff] %vm438, %v589
          %640 = vst.msk [vmem:[#allocation2 + $0x40] sm:$0xff] %vm438, %v594
          %641 = vst.msk [vmem:[#allocation2 + $0x48] sm:$0xff] %vm438, %v599
          %642 = vst.msk [vmem:[#allocation2 + $0x50] sm:$0xff] %vm438, %v604
          %643 = vst.msk [vmem:[#allocation2 + $0x58] sm:$0xff] %vm438, %v609
          %644 = vst.msk [vmem:[#allocation2 + $0x60] sm:$0xff] %vm438, %v614
          %645 = vst.msk [vmem:[#allocation2 + $0x68] sm:$0xff] %vm438, %v619
          %646 = vst.msk [vmem:[#allocation2 + $0x70] sm:$0xff] %vm438, %v624
          %647 = vst.msk [vmem:[#allocation2 + $0x78] sm:$0xff] %vm438, %v629
          %v648 = vld [vmem:[%s404] sm:$0xff]
          %v649 = vld [vmem:[%s404 + $0x8] sm:$0xff]
          %v650 = vld [vmem:[%s404 + $0x10] sm:$0xff]
          %v651 = vld [vmem:[%s404 + $0x18] sm:$0xff]
          %v652 = vld [vmem:[%s404 + $0x20] sm:$0xff]
          %v653 = vld [vmem:[%s404 + $0x28] sm:$0xff]
          %v654 = vld [vmem:[%s404 + $0x30] sm:$0xff]
          %v655 = vld [vmem:[%s404 + $0x38] sm:$0xff]
          %v656 = vld [vmem:[%s404 + $0x40] sm:$0xff]
          %v657 = vld [vmem:[%s404 + $0x48] sm:$0xff]
          %v658 = vld [vmem:[%s404 + $0x50] sm:$0xff]
          %v659 = vld [vmem:[%s404 + $0x58] sm:$0xff]
          %v660 = vld [vmem:[%s404 + $0x60] sm:$0xff]
          %v661 = vld [vmem:[%s404 + $0x68] sm:$0xff]
          %v662 = vld [vmem:[%s404 + $0x70] sm:$0xff]
          %v663 = vld [vmem:[%s404 + $0x78] sm:$0xff]
          %v664 = vld [vmem:[%s6] sm:$0xff]
          %v665 = vld [vmem:[%s6 + $0x8] sm:$0xff]
          %v666 = vld [vmem:[%s6 + $0x10] sm:$0xff]
          %v667 = vld [vmem:[%s6 + $0x18] sm:$0xff]
          %v668 = vld [vmem:[%s7] sm:$0x1]
          %v670 = vlaneseq
          %v671 = vshrl.u32 %v670, 7
          %v672 = vsub.s32 0, %v671
          %v673 = vrot.slane %v668, %v672
          %v676 = vsel %vm438, %v648, 0
          %v679 = vsel %vm438, %v649, 0
          %v682 = vsel %vm438, %v650, 0
          %v685 = vsel %vm438, %v651, 0
          %v688 = vsel %vm438, %v652, 0
          %v691 = vsel %vm438, %v653, 0
          %v694 = vsel %vm438, %v654, 0
          %v697 = vsel %vm438, %v655, 0
          %v700 = vsel %vm438, %v656, 0
          %v703 = vsel %vm438, %v657, 0
          %v706 = vsel %vm438, %v658, 0
          %v709 = vsel %vm438, %v659, 0
          %v712 = vsel %vm438, %v660, 0
          %v715 = vsel %vm438, %v661, 0
          %v718 = vsel %vm438, %v662, 0
          %v721 = vsel %vm438, %v663, 0
          %723 = vmatprep.subr.mxu0 0.0
          %724 = vmatpush1.msra.mxu0 %v664
          %725 = vmatprep.subr.mxu0 0.0
          %726 = vmatpush1.msra.mxu0 %v665
          %727 = vmatprep.subr.mxu0 0.0
          %728 = vmatpush1.msra.mxu0 %v666
          %729 = vmatprep.subr.mxu0 0.0
          %730 = vmatpush1.msra.mxu0 %v667
          %731 = vmatprep.subr.mxu0 0.0
          %732 = vmatpush1.msra.mxu0 0.0
          %733 = vmatprep.subr.mxu0 0.0
          %734 = vmatpush1.msra.mxu0 0.0
          %735 = vmatprep.subr.mxu0 0.0
          %736 = vmatpush1.msra.mxu0 0.0
          %737 = vmatprep.subr.mxu0 0.0
          %738 = vmatpush1.msra.mxu0 0.0
          %739 = vmatprep.subr.mxu0 0.0
          %740 = vmatpush1.msra.mxu0 0.0
          %741 = vmatprep.subr.mxu0 0.0
          %742 = vmatpush1.msra.mxu0 0.0
          %743 = vmatprep.subr.mxu0 0.0
          %744 = vmatpush1.msra.mxu0 0.0
          %745 = vmatprep.subr.mxu0 0.0
          %746 = vmatpush1.msra.mxu0 0.0
          %747 = vmatprep.subr.mxu0 0.0
          %748 = vmatpush1.msra.mxu0 0.0
          %749 = vmatprep.subr.mxu0 0.0
          %750 = vmatpush1.msra.mxu0 0.0
          %751 = vmatprep.subr.mxu0 0.0
          %752 = vmatpush1.msra.mxu0 0.0
          %753 = vmatprep.subr.mxu0 0.0
          %754 = vmatpush1.msra.mxu0 0.0
          %755 = vmatprep.subr.mxu0 0.0
          %756 = vmatpush1.msra.mxu0 0.0
          %757 = vmatprep.subr.mxu0 0.0
          %758 = vmatpush1.msra.mxu0 0.0
          %759 = vmatprep.subr.mxu0 0.0
          %760 = vmatpush1.msra.mxu0 0.0
          %761 = vmatprep.subr.mxu0 0.0
          %762 = vmatpush1.msra.mxu0 0.0
          %763 = vmatprep.subr.mxu0 0.0
          %764 = vmatpush1.msra.mxu0 0.0
          %765 = vmatprep.subr.mxu0 0.0
          %766 = vmatpush1.msra.mxu0 0.0
          %767 = vmatprep.subr.mxu0 0.0
          %768 = vmatpush1.msra.mxu0 0.0
          %769 = vmatprep.subr.mxu0 0.0
          %770 = vmatpush1.msra.mxu0 0.0
          %771 = vmatprep.subr.mxu0 0.0
          %772 = vmatpush1.msra.mxu0 0.0
          %773 = vmatprep.subr.mxu0 0.0
          %774 = vmatpush1.msra.mxu0 0.0
          %775 = vmatprep.subr.mxu0 0.0
          %776 = vmatpush1.msra.mxu0 0.0
          %777 = vmatprep.subr.mxu0 0.0
          %778 = vmatpush1.msra.mxu0 0.0
          %779 = vmatprep.subr.mxu0 0.0
          %780 = vmatpush1.msra.mxu0 0.0
          %781 = vmatprep.subr.mxu0 0.0
          %782 = vmatpush1.msra.mxu0 0.0
          %783 = vmatprep.subr.mxu0 0.0
          %784 = vmatpush1.msra.mxu0 0.0
          %785 = vmatprep.subr.mxu0 0.0
          %786 = vmatpush1.msra.mxu0 0.0
          %787 = vmatprep.mubr.f32.mxu0 0.0
          %788 = vmatmul.mubr.f32.gmra.mrb[0].mxu0 %v676
          %v789 = vpop.f32.mrb[0].mxu0
          %v790 = vadd.f32 %v673, %v789
          %v791 = vpop.f32.mrb[0].mxu0
          %792 = vmatprep.mubr.f32.mxu0 0.0
          %793 = vmatmul.mubr.f32.gmra.mrb[0].mxu0 %v679
          %v794 = vpop.f32.mrb[0].mxu0
          %v795 = vadd.f32 %v673, %v794
          %v796 = vpop.f32.mrb[0].mxu0
          %797 = vmatprep.mubr.f32.mxu0 0.0
          %798 = vmatmul.mubr.f32.gmra.mrb[0].mxu0 %v682
          %v799 = vpop.f32.mrb[0].mxu0
          %v800 = vadd.f32 %v673, %v799
          %v801 = vpop.f32.mrb[0].mxu0
          %802 = vmatprep.mubr.f32.mxu0 0.0
          %803 = vmatmul.mubr.f32.gmra.mrb[0].mxu0 %v685
          %v804 = vpop.f32.mrb[0].mxu0
          %v805 = vadd.f32 %v673, %v804
          %v806 = vpop.f32.mrb[0].mxu0
          %807 = vmatprep.mubr.f32.mxu0 0.0
          %808 = vmatmul.mubr.f32.gmra.mrb[0].mxu0 %v688
          %v809 = vpop.f32.mrb[0].mxu0
          %v810 = vadd.f32 %v673, %v809
          %v811 = vpop.f32.mrb[0].mxu0
          %812 = vmatprep.mubr.f32.mxu0 0.0
          %813 = vmatmul.mubr.f32.gmra.mrb[0].mxu0 %v691
          %v814 = vpop.f32.mrb[0].mxu0
          %v815 = vadd.f32 %v673, %v814
          %v816 = vpop.f32.mrb[0].mxu0
          %817 = vmatprep.mubr.f32.mxu0 0.0
          %818 = vmatmul.mubr.f32.gmra.mrb[0].mxu0 %v694
          %v819 = vpop.f32.mrb[0].mxu0
          %v820 = vadd.f32 %v673, %v819
          %v821 = vpop.f32.mrb[0].mxu0
          %822 = vmatprep.mubr.f32.mxu0 0.0
          %823 = vmatmul.mubr.f32.gmra.mrb[0].mxu0 %v697
          %v824 = vpop.f32.mrb[0].mxu0
          %v825 = vadd.f32 %v673, %v824
          %v826 = vpop.f32.mrb[0].mxu0
          %827 = vmatprep.mubr.f32.mxu0 0.0
          %828 = vmatmul.mubr.f32.gmra.mrb[0].mxu0 %v700
          %v829 = vpop.f32.mrb[0].mxu0
          %v830 = vadd.f32 %v673, %v829
          %v831 = vpop.f32.mrb[0].mxu0
          %832 = vmatprep.mubr.f32.mxu0 0.0
          %833 = vmatmul.mubr.f32.gmra.mrb[0].mxu0 %v703
          %v834 = vpop.f32.mrb[0].mxu0
          %v835 = vadd.f32 %v673, %v834
          %v836 = vpop.f32.mrb[0].mxu0
          %837 = vmatprep.mubr.f32.mxu0 0.0
          %838 = vmatmul.mubr.f32.gmra.mrb[0].mxu0 %v706
          %v839 = vpop.f32.mrb[0].mxu0
          %v840 = vadd.f32 %v673, %v839
          %v841 = vpop.f32.mrb[0].mxu0
          %842 = vmatprep.mubr.f32.mxu0 0.0
          %843 = vmatmul.mubr.f32.gmra.mrb[0].mxu0 %v709
          %v844 = vpop.f32.mrb[0].mxu0
          %v845 = vadd.f32 %v673, %v844
          %v846 = vpop.f32.mrb[0].mxu0
          %847 = vmatprep.mubr.f32.mxu0 0.0
          %848 = vmatmul.mubr.f32.gmra.mrb[0].mxu0 %v712
          %v849 = vpop.f32.mrb[0].mxu0
          %v850 = vadd.f32 %v673, %v849
          %v851 = vpop.f32.mrb[0].mxu0
          %852 = vmatprep.mubr.f32.mxu0 0.0
          %853 = vmatmul.mubr.f32.gmra.mrb[0].mxu0 %v715
          %v854 = vpop.f32.mrb[0].mxu0
          %v855 = vadd.f32 %v673, %v854
          %v856 = vpop.f32.mrb[0].mxu0
          %857 = vmatprep.mubr.f32.mxu0 0.0
          %858 = vmatmul.mubr.f32.gmra.mrb[0].mxu0 %v718
          %v859 = vpop.f32.mrb[0].mxu0
          %v860 = vadd.f32 %v673, %v859
          %v861 = vpop.f32.mrb[0].mxu0
          %862 = vmatprep.mubr.f32.mxu0 0.0
          %863 = vmatmul.mubr.f32.gmra.mrb[0].mxu0 %v721
          %v864 = vpop.f32.mrb[0].mxu0
          %v865 = vadd.f32 %v673, %v864
          %v866 = vpop.f32.mrb[0].mxu0
          %867 = vdwg.mxu0
          %868 = vst.msk [vmem:[#allocation3] sm:$0xff] %vm438, %v790
          %869 = vst.msk [vmem:[#allocation3 + $0x8] sm:$0xff] %vm438, %v795
          %870 = vst.msk [vmem:[#allocation3 + $0x10] sm:$0xff] %vm438, %v800
          %871 = vst.msk [vmem:[#allocation3 + $0x18] sm:$0xff] %vm438, %v805
          %872 = vst.msk [vmem:[#allocation3 + $0x20] sm:$0xff] %vm438, %v810
          %873 = vst.msk [vmem:[#allocation3 + $0x28] sm:$0xff] %vm438, %v815
          %874 = vst.msk [vmem:[#allocation3 + $0x30] sm:$0xff] %vm438, %v820
          %875 = vst.msk [vmem:[#allocation3 + $0x38] sm:$0xff] %vm438, %v825
          %876 = vst.msk [vmem:[#allocation3 + $0x40] sm:$0xff] %vm438, %v830
          %877 = vst.msk [vmem:[#allocation3 + $0x48] sm:$0xff] %vm438, %v835
          %878 = vst.msk [vmem:[#allocation3 + $0x50] sm:$0xff] %vm438, %v840
          %879 = vst.msk [vmem:[#allocation3 + $0x58] sm:$0xff] %vm438, %v845
          %880 = vst.msk [vmem:[#allocation3 + $0x60] sm:$0xff] %vm438, %v850
          %881 = vst.msk [vmem:[#allocation3 + $0x68] sm:$0xff] %vm438, %v855
          %882 = vst.msk [vmem:[#allocation3 + $0x70] sm:$0xff] %vm438, %v860
          %883 = vst.msk [vmem:[#allocation3 + $0x78] sm:$0xff] %vm438, %v865
        $region60: #{attention_block_forward.3} parent=55 // pred_fallthru
          _
        %s884 = smul.u32 %s33, 128
        %s885 = scalar_lea.vmem %s399, %s884
        %v886 = vld [vmem:[%s885] sm:$0xff]
        %v887 = vld [vmem:[%s885 + $0x8] sm:$0xff]
        %v888 = vld [vmem:[%s885 + $0x10] sm:$0xff]
        %v889 = vld [vmem:[%s885 + $0x18] sm:$0xff]
        %v890 = vld [vmem:[%s885 + $0x20] sm:$0xff]
        %v891 = vld [vmem:[%s885 + $0x28] sm:$0xff]
        %v892 = vld [vmem:[%s885 + $0x30] sm:$0xff]
        %v893 = vld [vmem:[%s885 + $0x38] sm:$0xff]
        %v894 = vld [vmem:[%s885 + $0x40] sm:$0xff]
        %v895 = vld [vmem:[%s885 + $0x48] sm:$0xff]
        %v896 = vld [vmem:[%s885 + $0x50] sm:$0xff]
        %v897 = vld [vmem:[%s885 + $0x58] sm:$0xff]
        %v898 = vld [vmem:[%s885 + $0x60] sm:$0xff]
        %v899 = vld [vmem:[%s885 + $0x68] sm:$0xff]
        %v900 = vld [vmem:[%s885 + $0x70] sm:$0xff]
        %v901 = vld [vmem:[%s885 + $0x78] sm:$0xff]
        %v902 = vld [vmem:[%s2] sm:$0xff]
        %v903 = vld [vmem:[%s2 + $0x8] sm:$0xff]
        %v904 = vld [vmem:[%s2 + $0x10] sm:$0xff]
        %v905 = vld [vmem:[%s2 + $0x18] sm:$0xff]
        %v906 = vld [vmem:[%s3] sm:$0x1]
        %v908 = vlaneseq
        %v909 = vshrl.u32 %v908, 7
        %v910 = vsub.s32 0, %v909
        %v911 = vrot.slane %v906, %v910
        %vm913 = vcmask 261120
        %v915 = vsel %vm913, %v886, 0
        %v918 = vsel %vm913, %v887, 0
        %v921 = vsel %vm913, %v888, 0
        %v924 = vsel %vm913, %v889, 0
        %v927 = vsel %vm913, %v890, 0
        %v930 = vsel %vm913, %v891, 0
        %v933 = vsel %vm913, %v892, 0
        %v936 = vsel %vm913, %v893, 0
        %v939 = vsel %vm913, %v894, 0
        %v942 = vsel %vm913, %v895, 0
        %v945 = vsel %vm913, %v896, 0
        %v948 = vsel %vm913, %v897, 0
        %v951 = vsel %vm913, %v898, 0
        %v954 = vsel %vm913, %v899, 0
        %v957 = vsel %vm913, %v900, 0
        %v960 = vsel %vm913, %v901, 0
        %962 = vmatprep.subr.mxu0 0.0
        %963 = vmatpush1.msra.mxu0 %v902
        %964 = vmatprep.subr.mxu0 0.0
        %965 = vmatpush1.msra.mxu0 %v903
        %966 = vmatprep.subr.mxu0 0.0
        %967 = vmatpush1.msra.mxu0 %v904
        %968 = vmatprep.subr.mxu0 0.0
        %969 = vmatpush1.msra.mxu0 %v905
        %970 = vmatprep.subr.mxu0 0.0
        %971 = vmatpush1.msra.mxu0 0.0
        %972 = vmatprep.subr.mxu0 0.0
        %973 = vmatpush1.msra.mxu0 0.0
        %974 = vmatprep.subr.mxu0 0.0
        %975 = vmatpush1.msra.mxu0 0.0
        %976 = vmatprep.subr.mxu0 0.0
        %977 = vmatpush1.msra.mxu0 0.0
        %978 = vmatprep.subr.mxu0 0.0
        %979 = vmatpush1.msra.mxu0 0.0
        %980 = vmatprep.subr.mxu0 0.0
        %981 = vmatpush1.msra.mxu0 0.0
        %982 = vmatprep.subr.mxu0 0.0
        %983 = vmatpush1.msra.mxu0 0.0
        %984 = vmatprep.subr.mxu0 0.0
        %985 = vmatpush1.msra.mxu0 0.0
        %986 = vmatprep.subr.mxu0 0.0
        %987 = vmatpush1.msra.mxu0 0.0
        %988 = vmatprep.subr.mxu0 0.0
        %989 = vmatpush1.msra.mxu0 0.0
        %990 = vmatprep.subr.mxu0 0.0
        %991 = vmatpush1.msra.mxu0 0.0
        %992 = vmatprep.subr.mxu0 0.0
        %993 = vmatpush1.msra.mxu0 0.0
        %994 = vmatprep.subr.mxu0 0.0
        %995 = vmatpush1.msra.mxu0 0.0
        %996 = vmatprep.subr.mxu0 0.0
        %997 = vmatpush1.msra.mxu0 0.0
        %998 = vmatprep.subr.mxu0 0.0
        %999 = vmatpush1.msra.mxu0 0.0
        %1000 = vmatprep.subr.mxu0 0.0
        %1001 = vmatpush1.msra.mxu0 0.0
        %1002 = vmatprep.subr.mxu0 0.0
        %1003 = vmatpush1.msra.mxu0 0.0
        %1004 = vmatprep.subr.mxu0 0.0
        %1005 = vmatpush1.msra.mxu0 0.0
        %1006 = vmatprep.subr.mxu0 0.0
        %1007 = vmatpush1.msra.mxu0 0.0
        %1008 = vmatprep.subr.mxu0 0.0
        %1009 = vmatpush1.msra.mxu0 0.0
        %1010 = vmatprep.subr.mxu0 0.0
        %1011 = vmatpush1.msra.mxu0 0.0
        %1012 = vmatprep.subr.mxu0 0.0
        %1013 = vmatpush1.msra.mxu0 0.0
        %1014 = vmatprep.subr.mxu0 0.0
        %1015 = vmatpush1.msra.mxu0 0.0
        %1016 = vmatprep.subr.mxu0 0.0
        %1017 = vmatpush1.msra.mxu0 0.0
        %1018 = vmatprep.subr.mxu0 0.0
        %1019 = vmatpush1.msra.mxu0 0.0
        %1020 = vmatprep.subr.mxu0 0.0
        %1021 = vmatpush1.msra.mxu0 0.0
        %1022 = vmatprep.subr.mxu0 0.0
        %1023 = vmatpush1.msra.mxu0 0.0
        %1024 = vmatprep.subr.mxu0 0.0
        %1025 = vmatpush1.msra.mxu0 0.0
        %1026 = vmatprep.mubr.f32.mxu0 0.0
        %1027 = vmatmul.mubr.f32.gmra.mrb[0].mxu0 %v915
        %v1028 = vpop.f32.mrb[0].mxu0
        %v1029 = vadd.f32 %v911, %v1028
        %v1030 = vpop.f32.mrb[0].mxu0
        %1031 = vmatprep.mubr.f32.mxu0 0.0
        %1032 = vmatmul.mubr.f32.gmra.mrb[0].mxu0 %v918
        %v1033 = vpop.f32.mrb[0].mxu0
        %v1034 = vadd.f32 %v911, %v1033
        %v1035 = vpop.f32.mrb[0].mxu0
        %1036 = vmatprep.mubr.f32.mxu0 0.0
        %1037 = vmatmul.mubr.f32.gmra.mrb[0].mxu0 %v921
        %v1038 = vpop.f32.mrb[0].mxu0
        %v1039 = vadd.f32 %v911, %v1038
        %v1040 = vpop.f32.mrb[0].mxu0
        %1041 = vmatprep.mubr.f32.mxu0 0.0
        %1042 = vmatmul.mubr.f32.gmra.mrb[0].mxu0 %v924
        %v1043 = vpop.f32.mrb[0].mxu0
        %v1044 = vadd.f32 %v911, %v1043
        %v1045 = vpop.f32.mrb[0].mxu0
        %1046 = vmatprep.mubr.f32.mxu0 0.0
        %1047 = vmatmul.mubr.f32.gmra.mrb[0].mxu0 %v927
        %v1048 = vpop.f32.mrb[0].mxu0
        %v1049 = vadd.f32 %v911, %v1048
        %v1050 = vpop.f32.mrb[0].mxu0
        %1051 = vmatprep.mubr.f32.mxu0 0.0
        %1052 = vmatmul.mubr.f32.gmra.mrb[0].mxu0 %v930
        %v1053 = vpop.f32.mrb[0].mxu0
        %v1054 = vadd.f32 %v911, %v1053
        %v1055 = vpop.f32.mrb[0].mxu0
        %1056 = vmatprep.mubr.f32.mxu0 0.0
        %1057 = vmatmul.mubr.f32.gmra.mrb[0].mxu0 %v933
        %v1058 = vpop.f32.mrb[0].mxu0
        %v1059 = vadd.f32 %v911, %v1058
        %v1060 = vpop.f32.mrb[0].mxu0
        %1061 = vmatprep.mubr.f32.mxu0 0.0
        %1062 = vmatmul.mubr.f32.gmra.mrb[0].mxu0 %v936
        %v1063 = vpop.f32.mrb[0].mxu0
        %v1064 = vadd.f32 %v911, %v1063
        %v1065 = vpop.f32.mrb[0].mxu0
        %1066 = vmatprep.mubr.f32.mxu0 0.0
        %1067 = vmatmul.mubr.f32.gmra.mrb[0].mxu0 %v939
        %v1068 = vpop.f32.mrb[0].mxu0
        %v1069 = vadd.f32 %v911, %v1068
        %v1070 = vpop.f32.mrb[0].mxu0
        %1071 = vmatprep.mubr.f32.mxu0 0.0
        %1072 = vmatmul.mubr.f32.gmra.mrb[0].mxu0 %v942
        %v1073 = vpop.f32.mrb[0].mxu0
        %v1074 = vadd.f32 %v911, %v1073
        %v1075 = vpop.f32.mrb[0].mxu0
        %1076 = vmatprep.mubr.f32.mxu0 0.0
        %1077 = vmatmul.mubr.f32.gmra.mrb[0].mxu0 %v945
        %v1078 = vpop.f32.mrb[0].mxu0
        %v1079 = vadd.f32 %v911, %v1078
        %v1080 = vpop.f32.mrb[0].mxu0
        %1081 = vmatprep.mubr.f32.mxu0 0.0
        %1082 = vmatmul.mubr.f32.gmra.mrb[0].mxu0 %v948
        %v1083 = vpop.f32.mrb[0].mxu0
        %v1084 = vadd.f32 %v911, %v1083
        %v1085 = vpop.f32.mrb[0].mxu0
        %1086 = vmatprep.mubr.f32.mxu0 0.0
        %1087 = vmatmul.mubr.f32.gmra.mrb[0].mxu0 %v951
        %v1088 = vpop.f32.mrb[0].mxu0
        %v1089 = vadd.f32 %v911, %v1088
        %v1090 = vpop.f32.mrb[0].mxu0
        %1091 = vmatprep.mubr.f32.mxu0 0.0
        %1092 = vmatmul.mubr.f32.gmra.mrb[0].mxu0 %v954
        %v1093 = vpop.f32.mrb[0].mxu0
        %v1094 = vadd.f32 %v911, %v1093
        %v1095 = vpop.f32.mrb[0].mxu0
        %1096 = vmatprep.mubr.f32.mxu0 0.0
        %1097 = vmatmul.mubr.f32.gmra.mrb[0].mxu0 %v957
        %v1098 = vpop.f32.mrb[0].mxu0
        %v1099 = vadd.f32 %v911, %v1098
        %v1100 = vpop.f32.mrb[0].mxu0
        %1101 = vmatprep.mubr.f32.mxu0 0.0
        %1102 = vmatmul.mubr.f32.gmra.mrb[0].mxu0 %v960
        %v1103 = vpop.f32.mrb[0].mxu0
        %v1104 = vadd.f32 %v911, %v1103
        %v1105 = vpop.f32.mrb[0].mxu0
        %1106 = vdwg.mxu0
        %v1107 = vld [vmem:[#allocation2] sm:$0xff]
        %v1108 = vld [vmem:[#allocation2 + $0x8] sm:$0xff]
        %v1109 = vld [vmem:[#allocation2 + $0x10] sm:$0xff]
        %v1110 = vld [vmem:[#allocation2 + $0x18] sm:$0xff]
        %v1111 = vld [vmem:[#allocation2 + $0x20] sm:$0xff]
        %v1112 = vld [vmem:[#allocation2 + $0x28] sm:$0xff]
        %v1113 = vld [vmem:[#allocation2 + $0x30] sm:$0xff]
        %v1114 = vld [vmem:[#allocation2 + $0x38] sm:$0xff]
        %v1115 = vld [vmem:[#allocation2 + $0x40] sm:$0xff]
        %v1116 = vld [vmem:[#allocation2 + $0x48] sm:$0xff]
        %v1117 = vld [vmem:[#allocation2 + $0x50] sm:$0xff]
        %v1118 = vld [vmem:[#allocation2 + $0x58] sm:$0xff]
        %v1119 = vld [vmem:[#allocation2 + $0x60] sm:$0xff]
        %v1120 = vld [vmem:[#allocation2 + $0x68] sm:$0xff]
        %v1121 = vld [vmem:[#allocation2 + $0x70] sm:$0xff]
        %v1122 = vld [vmem:[#allocation2 + $0x78] sm:$0xff]
        %v1124 = vsel %vm913, %v1029, 0
        %v1127 = vsel %vm913, %v1034, 0
        %v1130 = vsel %vm913, %v1039, 0
        %v1133 = vsel %vm913, %v1044, 0
        %v1136 = vsel %vm913, %v1049, 0
        %v1139 = vsel %vm913, %v1054, 0
        %v1142 = vsel %vm913, %v1059, 0
        %v1145 = vsel %vm913, %v1064, 0
        %v1148 = vsel %vm913, %v1069, 0
        %v1151 = vsel %vm913, %v1074, 0
        %v1154 = vsel %vm913, %v1079, 0
        %v1157 = vsel %vm913, %v1084, 0
        %v1160 = vsel %vm913, %v1089, 0
        %v1163 = vsel %vm913, %v1094, 0
        %v1166 = vsel %vm913, %v1099, 0
        %v1169 = vsel %vm913, %v1104, 0
        %v1172 = vsel %vm913, %v1107, 0
        %v1175 = vsel %vm913, %v1108, 0
        %v1178 = vsel %vm913, %v1109, 0
        %v1181 = vsel %vm913, %v1110, 0
        %v1184 = vsel %vm913, %v1111, 0
        %v1187 = vsel %vm913, %v1112, 0
        %v1190 = vsel %vm913, %v1113, 0
        %v1193 = vsel %vm913, %v1114, 0
        %v1196 = vsel %vm913, %v1115, 0
        %v1199 = vsel %vm913, %v1116, 0
        %v1202 = vsel %vm913, %v1117, 0
        %v1205 = vsel %vm913, %v1118, 0
        %v1208 = vsel %vm913, %v1119, 0
        %v1211 = vsel %vm913, %v1120, 0
        %v1214 = vsel %vm913, %v1121, 0
        %v1217 = vsel %vm913, %v1122, 0
        %1219 = vmatprep.subr.mxu0 0.0
        %1220 = vmatpush1.xpose.msra.mxu0 %v1172
        %1221 = vmatprep.subr.mxu0 0.0
        %1222 = vmatpush1.xpose.msra.mxu0 %v1175
        %1223 = vmatprep.subr.mxu0 0.0
        %1224 = vmatpush1.xpose.msra.mxu0 %v1178
        %1225 = vmatprep.subr.mxu0 0.0
        %1226 = vmatpush1.xpose.msra.mxu0 %v1181
        %1227 = vmatprep.subr.mxu0 0.0
        %1228 = vmatpush1.xpose.msra.mxu0 %v1184
        %1229 = vmatprep.subr.mxu0 0.0
        %1230 = vmatpush1.xpose.msra.mxu0 %v1187
        %1231 = vmatprep.subr.mxu0 0.0
        %1232 = vmatpush1.xpose.msra.mxu0 %v1190
        %1233 = vmatprep.subr.mxu0 0.0
        %1234 = vmatpush1.xpose.msra.mxu0 %v1193
        %1235 = vmatprep.subr.mxu0 0.0
        %1236 = vmatpush1.xpose.msra.mxu0 %v1196
        %1237 = vmatprep.subr.mxu0 0.0
        %1238 = vmatpush1.xpose.msra.mxu0 %v1199
        %1239 = vmatprep.subr.mxu0 0.0
        %1240 = vmatpush1.xpose.msra.mxu0 %v1202
        %1241 = vmatprep.subr.mxu0 0.0
        %1242 = vmatpush1.xpose.msra.mxu0 %v1205
        %1243 = vmatprep.subr.mxu0 0.0
        %1244 = vmatpush1.xpose.msra.mxu0 %v1208
        %1245 = vmatprep.subr.mxu0 0.0
        %1246 = vmatpush1.xpose.msra.mxu0 %v1211
        %1247 = vmatprep.subr.mxu0 0.0
        %1248 = vmatpush1.xpose.msra.mxu0 %v1214
        %1249 = vmatprep.subr.mxu0 0.0
        %1250 = vmatpush1.xpose.msra.mxu0 %v1217
        %1251 = vmatprep.subr.mxu0 0.0
        %1252 = vmatpush1.xpose.msra.mxu0 0.0
        %1253 = vmatprep.subr.mxu0 0.0
        %1254 = vmatpush1.xpose.msra.mxu0 0.0
        %1255 = vmatprep.subr.mxu0 0.0
        %1256 = vmatpush1.xpose.msra.mxu0 0.0
        %1257 = vmatprep.subr.mxu0 0.0
        %1258 = vmatpush1.xpose.msra.mxu0 0.0
        %1259 = vmatprep.subr.mxu0 0.0
        %1260 = vmatpush1.xpose.msra.mxu0 0.0
        %1261 = vmatprep.subr.mxu0 0.0
        %1262 = vmatpush1.xpose.msra.mxu0 0.0
        %1263 = vmatprep.subr.mxu0 0.0
        %1264 = vmatpush1.xpose.msra.mxu0 0.0
        %1265 = vmatprep.subr.mxu0 0.0
        %1266 = vmatpush1.xpose.msra.mxu0 0.0
        %1267 = vmatprep.subr.mxu0 0.0
        %1268 = vmatpush1.xpose.msra.mxu0 0.0
        %1269 = vmatprep.subr.mxu0 0.0
        %1270 = vmatpush1.xpose.msra.mxu0 0.0
        %1271 = vmatprep.subr.mxu0 0.0
        %1272 = vmatpush1.xpose.msra.mxu0 0.0
        %1273 = vmatprep.subr.mxu0 0.0
        %1274 = vmatpush1.xpose.msra.mxu0 0.0
        %1275 = vmatprep.subr.mxu0 0.0
        %1276 = vmatpush1.xpose.msra.mxu0 0.0
        %1277 = vmatprep.subr.mxu0 0.0
        %1278 = vmatpush1.xpose.msra.mxu0 0.0
        %1279 = vmatprep.subr.mxu0 0.0
        %1280 = vmatpush1.xpose.msra.mxu0 0.0
        %1281 = vmatprep.subr.mxu0 0.0
        %1282 = vmatpush1.xpose.msra.mxu0 0.0
        %1283 = vmatprep.mubr.f32.mxu0 0.0
        %1284 = vmatmul.mubr.f32.gmra.mrb[0].mxu0 %v1124
        %v1285 = vpop.f32.mrb[0].mxu0
        %v1286 = vadd.f32 0.0, %v1285
        %v1287 = vpop.f32.mrb[0].mxu0
        %1288 = vmatprep.mubr.f32.mxu0 0.0
        %1289 = vmatmul.mubr.f32.gmra.mrb[0].mxu0 %v1127
        %v1290 = vpop.f32.mrb[0].mxu0
        %v1291 = vadd.f32 0.0, %v1290
        %v1292 = vpop.f32.mrb[0].mxu0
        %1293 = vmatprep.mubr.f32.mxu0 0.0
        %1294 = vmatmul.mubr.f32.gmra.mrb[0].mxu0 %v1130
        %v1295 = vpop.f32.mrb[0].mxu0
        %v1296 = vadd.f32 0.0, %v1295
        %v1297 = vpop.f32.mrb[0].mxu0
        %1298 = vmatprep.mubr.f32.mxu0 0.0
        %1299 = vmatmul.mubr.f32.gmra.mrb[0].mxu0 %v1133
        %v1300 = vpop.f32.mrb[0].mxu0
        %v1301 = vadd.f32 0.0, %v1300
        %v1302 = vpop.f32.mrb[0].mxu0
        %1303 = vmatprep.mubr.f32.mxu0 0.0
        %1304 = vmatmul.mubr.f32.gmra.mrb[0].mxu0 %v1136
        %v1305 = vpop.f32.mrb[0].mxu0
        %v1306 = vadd.f32 0.0, %v1305
        %v1307 = vpop.f32.mrb[0].mxu0
        %1308 = vmatprep.mubr.f32.mxu0 0.0
        %1309 = vmatmul.mubr.f32.gmra.mrb[0].mxu0 %v1139
        %v1310 = vpop.f32.mrb[0].mxu0
        %v1311 = vadd.f32 0.0, %v1310
        %v1312 = vpop.f32.mrb[0].mxu0
        %1313 = vmatprep.mubr.f32.mxu0 0.0
        %1314 = vmatmul.mubr.f32.gmra.mrb[0].mxu0 %v1142
        %v1315 = vpop.f32.mrb[0].mxu0
        %v1316 = vadd.f32 0.0, %v1315
        %v1317 = vpop.f32.mrb[0].mxu0
        %1318 = vmatprep.mubr.f32.mxu0 0.0
        %1319 = vmatmul.mubr.f32.gmra.mrb[0].mxu0 %v1145
        %v1320 = vpop.f32.mrb[0].mxu0
        %v1321 = vadd.f32 0.0, %v1320
        %v1322 = vpop.f32.mrb[0].mxu0
        %1323 = vmatprep.mubr.f32.mxu0 0.0
        %1324 = vmatmul.mubr.f32.gmra.mrb[0].mxu0 %v1148
        %v1325 = vpop.f32.mrb[0].mxu0
        %v1326 = vadd.f32 0.0, %v1325
        %v1327 = vpop.f32.mrb[0].mxu0
        %1328 = vmatprep.mubr.f32.mxu0 0.0
        %1329 = vmatmul.mubr.f32.gmra.mrb[0].mxu0 %v1151
        %v1330 = vpop.f32.mrb[0].mxu0
        %v1331 = vadd.f32 0.0, %v1330
        %v1332 = vpop.f32.mrb[0].mxu0
        %1333 = vmatprep.mubr.f32.mxu0 0.0
        %1334 = vmatmul.mubr.f32.gmra.mrb[0].mxu0 %v1154
        %v1335 = vpop.f32.mrb[0].mxu0
        %v1336 = vadd.f32 0.0, %v1335
        %v1337 = vpop.f32.mrb[0].mxu0
        %1338 = vmatprep.mubr.f32.mxu0 0.0
        %1339 = vmatmul.mubr.f32.gmra.mrb[0].mxu0 %v1157
        %v1340 = vpop.f32.mrb[0].mxu0
        %v1341 = vadd.f32 0.0, %v1340
        %v1342 = vpop.f32.mrb[0].mxu0
        %1343 = vmatprep.mubr.f32.mxu0 0.0
        %1344 = vmatmul.mubr.f32.gmra.mrb[0].mxu0 %v1160
        %v1345 = vpop.f32.mrb[0].mxu0
        %v1346 = vadd.f32 0.0, %v1345
        %v1347 = vpop.f32.mrb[0].mxu0
        %1348 = vmatprep.mubr.f32.mxu0 0.0
        %1349 = vmatmul.mubr.f32.gmra.mrb[0].mxu0 %v1163
        %v1350 = vpop.f32.mrb[0].mxu0
        %v1351 = vadd.f32 0.0, %v1350
        %v1352 = vpop.f32.mrb[0].mxu0
        %1353 = vmatprep.mubr.f32.mxu0 0.0
        %1354 = vmatmul.mubr.f32.gmra.mrb[0].mxu0 %v1166
        %v1355 = vpop.f32.mrb[0].mxu0
        %v1356 = vadd.f32 0.0, %v1355
        %v1357 = vpop.f32.mrb[0].mxu0
        %1358 = vmatprep.mubr.f32.mxu0 0.0
        %1359 = vmatmul.mubr.f32.gmra.mrb[0].mxu0 %v1169
        %v1360 = vpop.f32.mrb[0].mxu0
        %v1361 = vadd.f32 0.0, %v1360
        %v1362 = vpop.f32.mrb[0].mxu0
        %1363 = vdwg.mxu0
        %1364 = vmax.xlane.f32.xlu0 %v1286
        %v1365 = vpop.xlane.xlu0 %1364
        %1366 = vmax.xlane.f32.xlu0 %v1291
        %v1367 = vpop.xlane.xlu0 %1366
        %1368 = vmax.xlane.f32.xlu0 %v1296
        %v1369 = vpop.xlane.xlu0 %1368
        %1370 = vmax.xlane.f32.xlu0 %v1301
        %v1371 = vpop.xlane.xlu0 %1370
        %1372 = vmax.xlane.f32.xlu0 %v1306
        %v1373 = vpop.xlane.xlu0 %1372
        %1374 = vmax.xlane.f32.xlu0 %v1311
        %v1375 = vpop.xlane.xlu0 %1374
        %1376 = vmax.xlane.f32.xlu0 %v1316
        %v1377 = vpop.xlane.xlu0 %1376
        %1378 = vmax.xlane.f32.xlu0 %v1321
        %v1379 = vpop.xlane.xlu0 %1378
        %1380 = vmax.xlane.f32.xlu0 %v1326
        %v1381 = vpop.xlane.xlu0 %1380
        %1382 = vmax.xlane.f32.xlu0 %v1331
        %v1383 = vpop.xlane.xlu0 %1382
        %1384 = vmax.xlane.f32.xlu0 %v1336
        %v1385 = vpop.xlane.xlu0 %1384
        %1386 = vmax.xlane.f32.xlu0 %v1341
        %v1387 = vpop.xlane.xlu0 %1386
        %1388 = vmax.xlane.f32.xlu0 %v1346
        %v1389 = vpop.xlane.xlu0 %1388
        %1390 = vmax.xlane.f32.xlu0 %v1351
        %v1391 = vpop.xlane.xlu0 %1390
        %1392 = vmax.xlane.f32.xlu0 %v1356
        %v1393 = vpop.xlane.xlu0 %1392
        %1394 = vmax.xlane.f32.xlu0 %v1361
        %v1395 = vpop.xlane.xlu0 %1394
        %v1396 = vsub.f32 %v1286, %v1365
        %v1397 = vsub.f32 %v1291, %v1367
        %v1398 = vsub.f32 %v1296, %v1369
        %v1399 = vsub.f32 %v1301, %v1371
        %v1400 = vsub.f32 %v1306, %v1373
        %v1401 = vsub.f32 %v1311, %v1375
        %v1402 = vsub.f32 %v1316, %v1377
        %v1403 = vsub.f32 %v1321, %v1379
        %v1404 = vsub.f32 %v1326, %v1381
        %v1405 = vsub.f32 %v1331, %v1383
        %v1406 = vsub.f32 %v1336, %v1385
        %v1407 = vsub.f32 %v1341, %v1387
        %v1408 = vsub.f32 %v1346, %v1389
        %v1409 = vsub.f32 %v1351, %v1391
        %v1410 = vsub.f32 %v1356, %v1393
        %v1411 = vsub.f32 %v1361, %v1395
        %v1412 = vmul.f32 %v1396, 1.442695
        %v1413 = vpow.pop %v1412
        %v1414 = vmul.f32 %v1397, 1.442695
        %v1415 = vpow.pop %v1414
        %v1416 = vmul.f32 %v1398, 1.442695
        %v1417 = vpow.pop %v1416
        %v1418 = vmul.f32 %v1399, 1.442695
        %v1419 = vpow.pop %v1418
        %v1420 = vmul.f32 %v1400, 1.442695
        %v1421 = vpow.pop %v1420
        %v1422 = vmul.f32 %v1401, 1.442695
        %v1423 = vpow.pop %v1422
        %v1424 = vmul.f32 %v1402, 1.442695
        %v1425 = vpow.pop %v1424
        %v1426 = vmul.f32 %v1403, 1.442695
        %v1427 = vpow.pop %v1426
        %v1428 = vmul.f32 %v1404, 1.442695
        %v1429 = vpow.pop %v1428
        %v1430 = vmul.f32 %v1405, 1.442695
        %v1431 = vpow.pop %v1430
        %v1432 = vmul.f32 %v1406, 1.442695
        %v1433 = vpow.pop %v1432
        %v1434 = vmul.f32 %v1407, 1.442695
        %v1435 = vpow.pop %v1434
        %v1436 = vmul.f32 %v1408, 1.442695
        %v1437 = vpow.pop %v1436
        %v1438 = vmul.f32 %v1409, 1.442695
        %v1439 = vpow.pop %v1438
        %v1440 = vmul.f32 %v1410, 1.442695
        %v1441 = vpow.pop %v1440
        %v1442 = vmul.f32 %v1411, 1.442695
        %v1443 = vpow.pop %v1442
        %1444 = vadd.xlane.f32.xlu0 %v1413
        %v1445 = vpop.xlane.xlu0 %1444
        %1446 = vadd.xlane.f32.xlu0 %v1415
        %v1447 = vpop.xlane.xlu0 %1446
        %1448 = vadd.xlane.f32.xlu0 %v1417
        %v1449 = vpop.xlane.xlu0 %1448
        %1450 = vadd.xlane.f32.xlu0 %v1419
        %v1451 = vpop.xlane.xlu0 %1450
        %1452 = vadd.xlane.f32.xlu0 %v1421
        %v1453 = vpop.xlane.xlu0 %1452
        %1454 = vadd.xlane.f32.xlu0 %v1423
        %v1455 = vpop.xlane.xlu0 %1454
        %1456 = vadd.xlane.f32.xlu0 %v1425
        %v1457 = vpop.xlane.xlu0 %1456
        %1458 = vadd.xlane.f32.xlu0 %v1427
        %v1459 = vpop.xlane.xlu0 %1458
        %1460 = vadd.xlane.f32.xlu0 %v1429
        %v1461 = vpop.xlane.xlu0 %1460
        %1462 = vadd.xlane.f32.xlu0 %v1431
        %v1463 = vpop.xlane.xlu0 %1462
        %1464 = vadd.xlane.f32.xlu0 %v1433
        %v1465 = vpop.xlane.xlu0 %1464
        %1466 = vadd.xlane.f32.xlu0 %v1435
        %v1467 = vpop.xlane.xlu0 %1466
        %1468 = vadd.xlane.f32.xlu0 %v1437
        %v1469 = vpop.xlane.xlu0 %1468
        %1470 = vadd.xlane.f32.xlu0 %v1439
        %v1471 = vpop.xlane.xlu0 %1470
        %1472 = vadd.xlane.f32.xlu0 %v1441
        %v1473 = vpop.xlane.xlu0 %1472
        %1474 = vadd.xlane.f32.xlu0 %v1443
        %v1475 = vpop.xlane.xlu0 %1474
        %v1476 = vrcp.pop %v1445
        %v1477 = vrcp.pop %v1447
        %v1478 = vrcp.pop %v1449
        %v1479 = vrcp.pop %v1451
        %v1480 = vrcp.pop %v1453
        %v1481 = vrcp.pop %v1455
        %v1482 = vrcp.pop %v1457
        %v1483 = vrcp.pop %v1459
        %v1484 = vrcp.pop %v1461
        %v1485 = vrcp.pop %v1463
        %v1486 = vrcp.pop %v1465
        %v1487 = vrcp.pop %v1467
        %v1488 = vrcp.pop %v1469
        %v1489 = vrcp.pop %v1471
        %v1490 = vrcp.pop %v1473
        %v1491 = vrcp.pop %v1475
        %v1492 = vmul.f32 %v1413, %v1476
        %v1493 = vmul.f32 %v1415, %v1477
        %v1494 = vmul.f32 %v1417, %v1478
        %v1495 = vmul.f32 %v1419, %v1479
        %v1496 = vmul.f32 %v1421, %v1480
        %v1497 = vmul.f32 %v1423, %v1481
        %v1498 = vmul.f32 %v1425, %v1482
        %v1499 = vmul.f32 %v1427, %v1483
        %v1500 = vmul.f32 %v1429, %v1484
        %v1501 = vmul.f32 %v1431, %v1485
        %v1502 = vmul.f32 %v1433, %v1486
        %v1503 = vmul.f32 %v1435, %v1487
        %v1504 = vmul.f32 %v1437, %v1488
        %v1505 = vmul.f32 %v1439, %v1489
        %v1506 = vmul.f32 %v1441, %v1490
        %v1507 = vmul.f32 %v1443, %v1491
        %1508 = vst [vmem:[%s394] sm:$0xff] %v1492
        %1509 = vst [vmem:[%s394 + $0x8] sm:$0xff] %v1493
        %1510 = vst [vmem:[%s394 + $0x10] sm:$0xff] %v1494
        %1511 = vst [vmem:[%s394 + $0x18] sm:$0xff] %v1495
        %1512 = vst [vmem:[%s394 + $0x20] sm:$0xff] %v1496
        %1513 = vst [vmem:[%s394 + $0x28] sm:$0xff] %v1497
        %1514 = vst [vmem:[%s394 + $0x30] sm:$0xff] %v1498
        %1515 = vst [vmem:[%s394 + $0x38] sm:$0xff] %v1499
        %1516 = vst [vmem:[%s394 + $0x40] sm:$0xff] %v1500
        %1517 = vst [vmem:[%s394 + $0x48] sm:$0xff] %v1501
        %1518 = vst [vmem:[%s394 + $0x50] sm:$0xff] %v1502
        %1519 = vst [vmem:[%s394 + $0x58] sm:$0xff] %v1503
        %1520 = vst [vmem:[%s394 + $0x60] sm:$0xff] %v1504
        %1521 = vst [vmem:[%s394 + $0x68] sm:$0xff] %v1505
        %1522 = vst [vmem:[%s394 + $0x70] sm:$0xff] %v1506
        %1523 = vst [vmem:[%s394 + $0x78] sm:$0xff] %v1507
        %v1524 = vld [vmem:[#allocation3] sm:$0xff]
        %v1525 = vld [vmem:[#allocation3 + $0x8] sm:$0xff]
        %v1526 = vld [vmem:[#allocation3 + $0x10] sm:$0xff]
        %v1527 = vld [vmem:[#allocation3 + $0x18] sm:$0xff]
        %v1528 = vld [vmem:[#allocation3 + $0x20] sm:$0xff]
        %v1529 = vld [vmem:[#allocation3 + $0x28] sm:$0xff]
        %v1530 = vld [vmem:[#allocation3 + $0x30] sm:$0xff]
        %v1531 = vld [vmem:[#allocation3 + $0x38] sm:$0xff]
        %v1532 = vld [vmem:[#allocation3 + $0x40] sm:$0xff]
        %v1533 = vld [vmem:[#allocation3 + $0x48] sm:$0xff]
        %v1534 = vld [vmem:[#allocation3 + $0x50] sm:$0xff]
        %v1535 = vld [vmem:[#allocation3 + $0x58] sm:$0xff]
        %v1536 = vld [vmem:[#allocation3 + $0x60] sm:$0xff]
        %v1537 = vld [vmem:[#allocation3 + $0x68] sm:$0xff]
        %v1538 = vld [vmem:[#allocation3 + $0x70] sm:$0xff]
        %v1539 = vld [vmem:[#allocation3 + $0x78] sm:$0xff]
        %v1540 = vld [vmem:[%s8] sm:$0x1]
        %v1542 = vlaneseq
        %v1543 = vshrl.u32 %v1542, 7
        %v1544 = vsub.s32 0, %v1543
        %v1545 = vrot.slane %v1540, %v1544
        %1547 = vmatprep.subr.mxu0 0.0
        %1548 = vmatpush1.msra.mxu0 %v1524
        %1549 = vmatprep.subr.mxu0 0.0
        %1550 = vmatpush1.msra.mxu0 %v1525
        %1551 = vmatprep.subr.mxu0 0.0
        %1552 = vmatpush1.msra.mxu0 %v1526
        %1553 = vmatprep.subr.mxu0 0.0
        %1554 = vmatpush1.msra.mxu0 %v1527
        %1555 = vmatprep.subr.mxu0 0.0
        %1556 = vmatpush1.msra.mxu0 %v1528
        %1557 = vmatprep.subr.mxu0 0.0
        %1558 = vmatpush1.msra.mxu0 %v1529
        %1559 = vmatprep.subr.mxu0 0.0
        %1560 = vmatpush1.msra.mxu0 %v1530
        %1561 = vmatprep.subr.mxu0 0.0
        %1562 = vmatpush1.msra.mxu0 %v1531
        %1563 = vmatprep.subr.mxu0 0.0
        %1564 = vmatpush1.msra.mxu0 %v1532
        %1565 = vmatprep.subr.mxu0 0.0
        %1566 = vmatpush1.msra.mxu0 %v1533
        %1567 = vmatprep.subr.mxu0 0.0
        %1568 = vmatpush1.msra.mxu0 %v1534
        %1569 = vmatprep.subr.mxu0 0.0
        %1570 = vmatpush1.msra.mxu0 %v1535
        %1571 = vmatprep.subr.mxu0 0.0
        %1572 = vmatpush1.msra.mxu0 %v1536
        %1573 = vmatprep.subr.mxu0 0.0
        %1574 = vmatpush1.msra.mxu0 %v1537
        %1575 = vmatprep.subr.mxu0 0.0
        %1576 = vmatpush1.msra.mxu0 %v1538
        %1577 = vmatprep.subr.mxu0 0.0
        %1578 = vmatpush1.msra.mxu0 %v1539
        %1579 = vmatprep.subr.mxu0 0.0
        %1580 = vmatpush1.msra.mxu0 0.0
        %1581 = vmatprep.subr.mxu0 0.0
        %1582 = vmatpush1.msra.mxu0 0.0
        %1583 = vmatprep.subr.mxu0 0.0
        %1584 = vmatpush1.msra.mxu0 0.0
        %1585 = vmatprep.subr.mxu0 0.0
        %1586 = vmatpush1.msra.mxu0 0.0
        %1587 = vmatprep.subr.mxu0 0.0
        %1588 = vmatpush1.msra.mxu0 0.0
        %1589 = vmatprep.subr.mxu0 0.0
        %1590 = vmatpush1.msra.mxu0 0.0
        %1591 = vmatprep.subr.mxu0 0.0
        %1592 = vmatpush1.msra.mxu0 0.0
        %1593 = vmatprep.subr.mxu0 0.0
        %1594 = vmatpush1.msra.mxu0 0.0
        %1595 = vmatprep.subr.mxu0 0.0
        %1596 = vmatpush1.msra.mxu0 0.0
        %1597 = vmatprep.subr.mxu0 0.0
        %1598 = vmatpush1.msra.mxu0 0.0
        %1599 = vmatprep.subr.mxu0 0.0
        %1600 = vmatpush1.msra.mxu0 0.0
        %1601 = vmatprep.subr.mxu0 0.0
        %1602 = vmatpush1.msra.mxu0 0.0
        %1603 = vmatprep.subr.mxu0 0.0
        %1604 = vmatpush1.msra.mxu0 0.0
        %1605 = vmatprep.subr.mxu0 0.0
        %1606 = vmatpush1.msra.mxu0 0.0
        %1607 = vmatprep.subr.mxu0 0.0
        %1608 = vmatpush1.msra.mxu0 0.0
        %1609 = vmatprep.subr.mxu0 0.0
        %1610 = vmatpush1.msra.mxu0 0.0
        %1611 = vmatprep.mubr.f32.mxu0 0.0
        %1612 = vmatmul.mubr.f32.gmra.mrb[0].mxu0 %v1492
        %v1613 = vpop.f32.mrb[0].mxu0
        %v1614 = vadd.f32 %v1545, %v1613
        %v1615 = vpop.f32.mrb[0].mxu0
        %1616 = vmatprep.mubr.f32.mxu0 0.0
        %1617 = vmatmul.mubr.f32.gmra.mrb[0].mxu0 %v1493
        %v1618 = vpop.f32.mrb[0].mxu0
        %v1619 = vadd.f32 %v1545, %v1618
        %v1620 = vpop.f32.mrb[0].mxu0
        %1621 = vmatprep.mubr.f32.mxu0 0.0
        %1622 = vmatmul.mubr.f32.gmra.mrb[0].mxu0 %v1494
        %v1623 = vpop.f32.mrb[0].mxu0
        %v1624 = vadd.f32 %v1545, %v1623
        %v1625 = vpop.f32.mrb[0].mxu0
        %1626 = vmatprep.mubr.f32.mxu0 0.0
        %1627 = vmatmul.mubr.f32.gmra.mrb[0].mxu0 %v1495
        %v1628 = vpop.f32.mrb[0].mxu0
        %v1629 = vadd.f32 %v1545, %v1628
        %v1630 = vpop.f32.mrb[0].mxu0
        %1631 = vmatprep.mubr.f32.mxu0 0.0
        %1632 = vmatmul.mubr.f32.gmra.mrb[0].mxu0 %v1496
        %v1633 = vpop.f32.mrb[0].mxu0
        %v1634 = vadd.f32 %v1545, %v1633
        %v1635 = vpop.f32.mrb[0].mxu0
        %1636 = vmatprep.mubr.f32.mxu0 0.0
        %1637 = vmatmul.mubr.f32.gmra.mrb[0].mxu0 %v1497
        %v1638 = vpop.f32.mrb[0].mxu0
        %v1639 = vadd.f32 %v1545, %v1638
        %v1640 = vpop.f32.mrb[0].mxu0
        %1641 = vmatprep.mubr.f32.mxu0 0.0
        %1642 = vmatmul.mubr.f32.gmra.mrb[0].mxu0 %v1498
        %v1643 = vpop.f32.mrb[0].mxu0
        %v1644 = vadd.f32 %v1545, %v1643
        %v1645 = vpop.f32.mrb[0].mxu0
        %1646 = vmatprep.mubr.f32.mxu0 0.0
        %1647 = vmatmul.mubr.f32.gmra.mrb[0].mxu0 %v1499
        %v1648 = vpop.f32.mrb[0].mxu0
        %v1649 = vadd.f32 %v1545, %v1648
        %v1650 = vpop.f32.mrb[0].mxu0
        %1651 = vmatprep.mubr.f32.mxu0 0.0
        %1652 = vmatmul.mubr.f32.gmra.mrb[0].mxu0 %v1500
        %v1653 = vpop.f32.mrb[0].mxu0
        %v1654 = vadd.f32 %v1545, %v1653
        %v1655 = vpop.f32.mrb[0].mxu0
        %1656 = vmatprep.mubr.f32.mxu0 0.0
        %1657 = vmatmul.mubr.f32.gmra.mrb[0].mxu0 %v1501
        %v1658 = vpop.f32.mrb[0].mxu0
        %v1659 = vadd.f32 %v1545, %v1658
        %v1660 = vpop.f32.mrb[0].mxu0
        %1661 = vmatprep.mubr.f32.mxu0 0.0
        %1662 = vmatmul.mubr.f32.gmra.mrb[0].mxu0 %v1502
        %v1663 = vpop.f32.mrb[0].mxu0
        %v1664 = vadd.f32 %v1545, %v1663
        %v1665 = vpop.f32.mrb[0].mxu0
        %1666 = vmatprep.mubr.f32.mxu0 0.0
        %1667 = vmatmul.mubr.f32.gmra.mrb[0].mxu0 %v1503
        %v1668 = vpop.f32.mrb[0].mxu0
        %v1669 = vadd.f32 %v1545, %v1668
        %v1670 = vpop.f32.mrb[0].mxu0
        %1671 = vmatprep.mubr.f32.mxu0 0.0
        %1672 = vmatmul.mubr.f32.gmra.mrb[0].mxu0 %v1504
        %v1673 = vpop.f32.mrb[0].mxu0
        %v1674 = vadd.f32 %v1545, %v1673
        %v1675 = vpop.f32.mrb[0].mxu0
        %1676 = vmatprep.mubr.f32.mxu0 0.0
        %1677 = vmatmul.mubr.f32.gmra.mrb[0].mxu0 %v1505
        %v1678 = vpop.f32.mrb[0].mxu0
        %v1679 = vadd.f32 %v1545, %v1678
        %v1680 = vpop.f32.mrb[0].mxu0
        %1681 = vmatprep.mubr.f32.mxu0 0.0
        %1682 = vmatmul.mubr.f32.gmra.mrb[0].mxu0 %v1506
        %v1683 = vpop.f32.mrb[0].mxu0
        %v1684 = vadd.f32 %v1545, %v1683
        %v1685 = vpop.f32.mrb[0].mxu0
        %1686 = vmatprep.mubr.f32.mxu0 0.0
        %1687 = vmatmul.mubr.f32.gmra.mrb[0].mxu0 %v1507
        %v1688 = vpop.f32.mrb[0].mxu0
        %v1689 = vadd.f32 %v1545, %v1688
        %v1690 = vpop.f32.mrb[0].mxu0
        %1691 = vdwg.mxu0
        %1692 = vst.msk [vmem:[%s387] sm:$0xff] %vm913, %v1614
        %1693 = vst.msk [vmem:[%s387 + $0x8] sm:$0xff] %vm913, %v1619
        %1694 = vst.msk [vmem:[%s387 + $0x10] sm:$0xff] %vm913, %v1624
        %1695 = vst.msk [vmem:[%s387 + $0x18] sm:$0xff] %vm913, %v1629
        %1696 = vst.msk [vmem:[%s387 + $0x20] sm:$0xff] %vm913, %v1634
        %1697 = vst.msk [vmem:[%s387 + $0x28] sm:$0xff] %vm913, %v1639
        %1698 = vst.msk [vmem:[%s387 + $0x30] sm:$0xff] %vm913, %v1644
        %1699 = vst.msk [vmem:[%s387 + $0x38] sm:$0xff] %vm913, %v1649
        %1700 = vst.msk [vmem:[%s387 + $0x40] sm:$0xff] %vm913, %v1654
        %1701 = vst.msk [vmem:[%s387 + $0x48] sm:$0xff] %vm913, %v1659
        %1702 = vst.msk [vmem:[%s387 + $0x50] sm:$0xff] %vm913, %v1664
        %1703 = vst.msk [vmem:[%s387 + $0x58] sm:$0xff] %vm913, %v1669
        %1704 = vst.msk [vmem:[%s387 + $0x60] sm:$0xff] %vm913, %v1674
        %1705 = vst.msk [vmem:[%s387 + $0x68] sm:$0xff] %vm913, %v1679
        %1706 = vst.msk [vmem:[%s387 + $0x70] sm:$0xff] %vm913, %v1684
        %1707 = vst.msk [vmem:[%s387 + $0x78] sm:$0xff] %vm913, %v1689
        %s1708 = sand.u32 %s249, 1
        %s1709 = scalar_lea.sflag [#allocation5], %s1708
        %s1710 = sand.u32 %s249, 1
        %s1711 = smul.addr %s1710, 128
        %s1712 = scalar_lea.vmem [#allocation4], %s1711
        %s1713 = sand.u32 %s277, 1
        %s1714 = scalar_lea.sflag [#allocation7], %s1713
        %s1715 = sand.u32 %s277, 1
        %s1716 = smul.addr %s1715, 128
        %s1717 = scalar_lea.vmem [#allocation6], %s1716
        // Predicated region
        $region61: #{attention_block_forward.3} parent=55 // pred_check
          %p1718 = pneg %p259
        $region62: #{attention_block_forward.3} parent=55 // pred_check_branch
          %1720 = sbr.rel (%p1718) target = $region64
        $region63: #{attention_block_forward.3} parent=55 // pred_region
          %s1721 = smul.u32 16, %s33
          %s1723 = ssub.s32 2048, 2048
          %1724 = vsyncadd %s1709, %s1723
          %s1725 = smul.addr %s32, 16
          %s1726 = sadd.s32 %s1721, %s1725
          %s1727 = smul.addr %s1726, 128
          %s1728 = scalar_lea.hbm %s9, %s1727
          %s1729 = sshll.u32 %s1712, 4
          %s1730 = int_to_ptr.vmem [resolvable:$true] %s1729
          %1735 = dma.vmem_to_hbm [thread:$0]  %s1730, 2048, %s1728, %s1709, 128, 128, 8
        $region64: #{attention_block_forward.3} parent=55 // pred_fallthru
          _
        // Predicated region
        $region65: #{attention_block_forward.3} parent=55 // pred_check
          %p1736 = pneg %p287
        $region66: #{attention_block_forward.3} parent=55 // pred_check_branch
          %1738 = sbr.rel (%p1736) target = $region68
        $region67: #{attention_block_forward.3} parent=55 // pred_region
          %s1739 = smul.u32 16, %s33
          %s1741 = ssub.s32 2048, 2048
          %1742 = vsyncadd %s1714, %s1741
          %s1743 = smul.addr %s32, 16
          %s1744 = sadd.s32 %s1739, %s1743
          %s1745 = smul.addr %s1744, 128
          %s1746 = scalar_lea.hbm %s10, %s1745
          %s1747 = sshll.u32 %s1717, 4
          %s1748 = int_to_ptr.vmem [resolvable:$true] %s1747
          %1753 = dma.vmem_to_hbm [thread:$0]  %s1748, 2048, %s1746, %s1714, 128, 128, 8
        $region68: #{attention_block_forward.3} parent=55 // pred_fallthru
          _
      $region56: #{attention_block_forward.3} parent=5 // pred_fallthru
        _
      %p1754 = scmp.le.s32.totalorder 2, %s23
      // Predicated region
      $region69: #{attention_block_forward.3} parent=5 // pred_check
        %p1755 = pneg %p1754
      $region70: #{attention_block_forward.3} parent=5 // pred_check_branch
        %1757 = sbr.rel (%p1755) target = $region72
      $region71: #{attention_block_forward.3} parent=5 // pred_region
        %s1758 = ssub.s32 %s23, 2
        // Predicated region
        $region73: #{attention_block_forward.3} parent=71 // pred_check
          %p1759 = pneg %p265
        $region74: #{attention_block_forward.3} parent=71 // pred_check_branch
          %1761 = sbr.rel (%p1759) target = $region76
        $region75: #{attention_block_forward.3} parent=71 // pred_region
          %s1762 = sand.u32 %s250, 1
          %s1763 = scalar_lea.sflag [#allocation5], %s1762
          %s1764 = sand.u32 %s250, 1
          %s1765 = smul.addr %s1764, 128
          %s1766 = scalar_lea.vmem [#allocation4], %s1765
          %1767 = dma.done %s1763, 2048
        $region76: #{attention_block_forward.3} parent=71 // pred_fallthru
          _
        // Predicated region
        $region77: #{attention_block_forward.3} parent=71 // pred_check
          %p1768 = pneg %p293
        $region78: #{attention_block_forward.3} parent=71 // pred_check_branch
          %1770 = sbr.rel (%p1768) target = $region80
        $region79: #{attention_block_forward.3} parent=71 // pred_region
          %s1771 = sand.u32 %s278, 1
          %s1772 = scalar_lea.sflag [#allocation7], %s1771
          %s1773 = sand.u32 %s278, 1
          %s1774 = smul.addr %s1773, 128
          %s1775 = scalar_lea.vmem [#allocation6], %s1774
          %1776 = dma.done %s1772, 2048
        $region80: #{attention_block_forward.3} parent=71 // pred_fallthru
          _
      $region72: #{attention_block_forward.3} parent=5 // pred_fallthru
        _
    $region6: #{attention_block_forward.3} parent=1 // loop_footer
      %s27 = sadd.s32 1, %s23
    $region7: #{attention_block_forward.3} parent=1 // loop_footer_branch
      %22 = sbr.rel target = $region3
    $region8: #{attention_block_forward.3} parent=1 // loop_exit
      _
    %1777 = vsyncpa [#allocation5], 1
    %s1778 = scalar_lea.sflag [#allocation5], 1
    %1779 = vsyncpa %s1778, 1
    %1780 = vsyncpa [#allocation7], 1
    %s1781 = scalar_lea.sflag [#allocation7], 1
    %1782 = vsyncpa %s1781, 1

</llo_original>
